<compile_context>
chip_gen: v7x
topology: tpu7x:2x2x1
jax: 0.10.0
libtpu: 0.0.40
codegen_flags: <defaults>
</compile_context>

<pallas_src>
import functools
import math

import jax
import jax.numpy as jnp
from jax.experimental import pallas as pl
from jax.experimental.pallas import tpu as pltpu

EMB_DIM = 64
NUM_HEADS = max(EMB_DIM // 64, 1)      # matches `num_heads = emb_dim // 64` in the module
HEAD_DIM = EMB_DIM // NUM_HEADS

_COMPILER_PARAMS = pltpu.CompilerParams(
    dimension_semantics=("arbitrary",),
    vmem_limit_bytes=48 * 1024 * 1024,   # leaves headroom under v7x's 64 MiB physical VMEM
)


# ----------------------------- in-kernel helpers ----------------------------

def _leaky_relu(h):
    # F.leaky_relu default slope, 2 VALU ops (max) instead of cmp+mul+select.
    return jnp.maximum(h, jnp.float32(0.01) * h)


def _onehot_bf16(mask_b):
    # bool -> bf16 one-hot (exact values 0.0 / 1.0) for MXU gathers / scatters.
    return mask_b.astype(jnp.float32).astype(jnp.bfloat16)


def _head_logits(hm, num_heads, head_dim):
    # einsum('nhc,hc->nh') with hm = h * w2_row: a lane reduction per head chunk.
    if num_heads == 1:
        return jnp.sum(hm, axis=1, keepdims=True)                      # (M, 1)
    return jnp.concatenate(
        [jnp.sum(hm[:, h * head_dim:(h + 1) * head_dim], axis=1, keepdims=True)
         for h in range(num_heads)], axis=1)                           # (M, H)


def _segment_attn(mask_b, logits, num_heads, head_dim):
    """torch_geometric softmax over segments defined by the bool mask.

    mask_b: (M, S) bool (exactly one True per row), logits: (M, H) f32.
    Returns attention weights expanded to (M, H*head_dim) f32.
    Only bool mask + f32 scalars are live; masked reductions via jnp.where.
    """
    f32 = jnp.float32
    M = logits.shape[0]
    NEG = f32(-1e30)    # finite sentinel (matches segment_max semantics for used rows)

    cols = []
    for h in range(num_heads):
        lg = logits[:, h:h + 1]                                              # (M, 1)
        seg_max = jnp.max(jnp.where(mask_b, lg, NEG), axis=0, keepdims=True)      # (1, S)
        g_max = jnp.max(jnp.where(mask_b, seg_max, NEG), axis=1, keepdims=True)   # (M, 1)
        p = jnp.exp(lg - g_max)                                              # (M, 1)
        seg_sum = jnp.sum(jnp.where(mask_b, p, f32(0.0)), axis=0, keepdims=True)  # (1, S)
        g_sum = jnp.sum(jnp.where(mask_b, seg_sum, f32(0.0)), axis=1, keepdims=True)
        cols.append(p / (g_sum + f32(1e-16)))
    if num_heads == 1:
        return jnp.broadcast_to(cols[0], (M, head_dim))
    return jnp.concatenate(
        [jnp.broadcast_to(c, (M, head_dim)) for c in cols], axis=1)


def _scatter_T(onehot_bf16, weighted_bf16):
    # segment scatter-sum: onehot^T @ weighted on the MXU, bf16 operands, f32 acc.
    return jax.lax.dot_general(onehot_bf16, weighted_bf16,
                               (((0,), (0,)), ((), ())),
                               preferred_element_type=jnp.float32)


# ------------------------------- fused kernel -------------------------------
# edge Linear + NodeAttn(sent|recv) + node Linear + GlobalAttn(nodes|edges) + global Linear

def _metalayer_kernel(x_ref, eattr_ref, u_ref,
                      row_ref, col_ref, nb_ref, eb_ref,
                      we_ref, be_ref,
                      naw_ref, nab_ref, naw2_ref,
                      wn_ref, bn_ref,
                      gnw_ref, gnb_ref, gnw2_ref,
                      gew_ref, geb_ref, gew2_ref,
                      wg_ref, bg_ref,
                      xnew_ref, enew_ref, unew_ref,
                      *, num_heads, head_dim):
    f32, bf16 = jnp.float32, jnp.bfloat16
    N, D = x_ref.shape
    E = eattr_ref.shape[0]
    G = u_ref.shape[0]

    x_b = x_ref[...].astype(bf16)            # (N, D)
    e_b = eattr_ref[...].astype(bf16)        # (E, D)
    u_b = u_ref[...].astype(bf16)            # (G, D)

    # ---- boolean one-hot masks (bool kept for masked reductions; one bf16 copy) ----
    iota_n = jax.lax.broadcasted_iota(jnp.int32, (1, N), 1)
    iota_g = jax.lax.broadcasted_iota(jnp.int32, (1, G), 1)
    row_m = row_ref[...] == iota_n           # (E, N)
    col_m = col_ref[...] == iota_n           # (E, N)
    nb_m = nb_ref[...] == iota_g             # (N, G)
    eb_m = eb_ref[...] == iota_g             # (E, G)
    row_oh = _onehot_bf16(row_m)
    col_oh = _onehot_bf16(col_m)
    nb_oh = _onehot_bf16(nb_m)
    eb_oh = _onehot_bf16(eb_m)

    # ---- in-kernel gathers (onehot @ table on the MXU; exact for bf16 tables):
    #      x[row], x[col], u[edge_batch], u[node_batch] never touch HBM. ----
    x_row = jnp.dot(row_oh, x_b, preferred_element_type=f32).astype(bf16)   # (E, D)
    x_col = jnp.dot(col_oh, x_b, preferred_element_type=f32).astype(bf16)   # (E, D)
    u_edg = jnp.dot(eb_oh, u_b, preferred_element_type=f32).astype(bf16)    # (E, D)
    u_nod = jnp.dot(nb_oh, u_b, preferred_element_type=f32).astype(bf16)    # (N, D)

    # ---- edge model: single full-depth K=4D dot (no split-K accumulation) ----
    e_in = jnp.concatenate([e_b, x_row, x_col, u_edg], axis=1)              # (E, 4D) bf16
    e_new = jnp.dot(e_in, we_ref[...], preferred_element_type=f32) + be_ref[...]
    enew_ref[...] = e_new.astype(enew_ref.dtype)
    e_new_b = e_new.astype(bf16)

    # ---- NodeAttn, sent & recv stacked along M; fused [w1 | w3] -> lane-dense [h | v] ----
    sent_in = jnp.concatenate([x_row, x_col, e_new_b], axis=1)              # (E, 3D)
    recv_in = jnp.concatenate([x_col, x_row, e_new_b], axis=1)              # (E, 3D)
    attn_in = jnp.concatenate([sent_in, recv_in], axis=0)                   # (2E, 3D)
    hv = jnp.dot(attn_in, naw_ref[...], preferred_element_type=f32) + nab_ref[...]  # (2E, 2D)
    h = _leaky_relu(hv[:, 0:D])                                             # w1 path
    v = hv[:, D:2 * D]                                                      # w3 value path
    logits = _head_logits(h * naw2_ref[...], num_heads, head_dim)           # (2E, H)

    # separate softmaxes: sent is normalized over `row`, recv over `col`
    attn_sent = _segment_attn(row_m, logits[0:E], num_heads, head_dim)      # (E, D)
    attn_recv = _segment_attn(col_m, logits[E:2 * E], num_heads, head_dim)  # (E, D)
    w_sent = (attn_sent * v[0:E]).astype(bf16)
    w_recv = (attn_recv * v[E:2 * E]).astype(bf16)
    z_ed = jnp.zeros((E, D), bf16)
    weighted = jnp.concatenate(
        [jnp.concatenate([w_sent, z_ed], axis=1),
         jnp.concatenate([z_ed, w_recv], axis=1)], axis=0)                  # (2E, 2D)
    oh_stack = jnp.concatenate([row_oh, col_oh], axis=0)                    # (2E, N)
    sent_recv = _scatter_T(oh_stack, weighted)                              # (N, 2D) [sent|recv]

    # ---- node model: single K=4D dot consuming the lane-dense [sent|recv] block ----
    n_in = jnp.concatenate([x_b, sent_recv.astype(bf16), u_nod], axis=1)    # (N, 4D)
    x_new = jnp.dot(n_in, wn_ref[...], preferred_element_type=f32) + bn_ref[...]
    xnew_ref[...] = x_new.astype(xnew_ref.dtype)
    x_new_b = x_new.astype(bf16)

    # ---- GlobalAttn over nodes & edges (K=2D dots), stacked scatter to (G, 2D) ----
    hn = _leaky_relu(jnp.dot(jnp.concatenate([u_nod, x_new_b], axis=1), gnw_ref[...],
                             preferred_element_type=f32) + gnb_ref[...])    # (N, D)
    he = _leaky_relu(jnp.dot(jnp.concatenate([u_edg, e_new_b], axis=1), gew_ref[...],
                             preferred_element_type=f32) + geb_ref[...])    # (E, D)
    attn_n = _segment_attn(nb_m, _head_logits(hn * gnw2_ref[...], num_heads, head_dim),
                           num_heads, head_dim)                             # (N, D)
    attn_e = _segment_attn(eb_m, _head_logits(he * gew2_ref[...], num_heads, head_dim),
                           num_heads, head_dim)                             # (E, D)
    w_n = (attn_n * x_new).astype(bf16)                                     # value = k (x_new)
    w_e = (attn_e * e_new).astype(bf16)                                     # value = k (e_new)
    wg_stack = jnp.concatenate(
        [jnp.concatenate([w_n, jnp.zeros((N, D), bf16)], axis=1),
         jnp.concatenate([jnp.zeros((E, D), bf16), w_e], axis=1)], axis=0)  # (N+E, 2D)
    ohg_stack = jnp.concatenate([nb_oh, eb_oh], axis=0)                     # (N+E, G)
    attrs = _scatter_T(ohg_stack, wg_stack)                                 # (G, 2D) [node|edge]

    # ---- global model: single K=3D dot ----
    g_in = jnp.concatenate([u_b, attrs.astype(bf16)], axis=1)               # (G, 3D)
    u_new = jnp.dot(g_in, wg_ref[...], preferred_element_type=f32) + bg_ref[...]
    unew_ref[...] = u_new.astype(unew_ref.dtype)


# --------------------------------- wrapper ----------------------------------

def _full_spec(shape):
    # single-step grid: every array is one full-extent block (all 2-D here)
    return pl.BlockSpec(shape, lambda i: (0, 0))


def metalayer_forward(kparams, x, edge_index, edge_attr, u, node_batch, edge_batch):
    N, D = x.shape
    E = edge_attr.shape[0]
    G = u.shape[0]
    row = edge_index[0].reshape(E, 1).astype(jnp.int32)
    col = edge_index[1].reshape(E, 1).astype(jnp.int32)
    nb = node_batch.reshape(N, 1).astype(jnp.int32)
    eb = edge_batch.reshape(E, 1).astype(jnp.int32)

    kp = kparams
    args = (x, edge_attr, u, row, col, nb, eb,
            kp["we"], kp["be"],
            kp["na_w"], kp["na_b"], kp["na_w2"],
            kp["wn"], kp["bn"],
            kp["gn_w"], kp["gn_b"], kp["gn_w2"],
            kp["ge_w"], kp["ge_b"], kp["ge_w2"],
            kp["wg"], kp["bg"])
    kern = functools.partial(_metalayer_kernel, num_heads=NUM_HEADS, head_dim=HEAD_DIM)

    x_new, e_new, u_new = pl.pallas_call(
        kern,
        out_shape=(jax.ShapeDtypeStruct((N, D), jnp.float32),
                   jax.ShapeDtypeStruct((E, D), jnp.float32),
                   jax.ShapeDtypeStruct((G, D), jnp.float32)),
        grid=(1,),
        in_specs=[_full_spec(a.shape) for a in args],
        out_specs=(_full_spec((N, D)), _full_spec((E, D)), _full_spec((G, D))),
        compiler_params=_COMPILER_PARAMS,
    )(*args)

    # TODO(synk): face_model / face_attn / residual branches not exercised (face_index=None).
    return x_new, e_new, u_new, None


# ------------------------- parameter initialization ------------------------

def _xavier(key, fan_in, fan_out, gain):
    lim = gain * math.sqrt(6.0 / (fan_in + fan_out))
    return jax.random.uniform(key, (fan_in, fan_out), jnp.float32, -lim, lim)


def init_params(key, D=EMB_DIM, H=NUM_HEADS):
    hd = D // H
    g = 1.0 / math.sqrt(2.0)
    ks = jax.random.split(key, 17)
    b = lambda k: 0.1 * jax.random.normal(k, (1, D), jnp.float32)
    return {
        "edge": {"w": _xavier(ks[0], 4 * D, D, g), "b": b(ks[10])},
        "node": {"w": _xavier(ks[1], 4 * D, D, g), "b": b(ks[11])},
        "glob": {"w": _xavier(ks[2], 3 * D, D, g), "b": b(ks[12])},
        "node_attn": {
            "w1": _xavier(ks[3], 3 * D, D, g), "b1": b(ks[13]),
            "w2_flat": _xavier(ks[4], H, hd, g).reshape(1, D),
            "w3": _xavier(ks[5], 2 * D, D, g), "b3": b(ks[14]),
        },
        "g_node_attn": {
            "w1": _xavier(ks[6], 2 * D, D, g), "b1": b(ks[15]),
            "w2_flat": _xavier(ks[7], H, hd, g).reshape(1, D),
        },
        "g_edge_attn": {
            "w1": _xavier(ks[8], 2 * D, D, g), "b1": b(ks[16]),
            "w2_flat": _xavier(ks[9], H, hd, g).reshape(1, D),
        },
    }


def prepare_kernel_params(params, D=EMB_DIM):
    """One-time packing: bf16 weights + fused NodeAttn [w1 | w3] weight / [b1 | b3] bias."""
    bf16 = jnp.bfloat16
    na = params["node_attn"]
    na_w = jnp.concatenate([
        jnp.concatenate([na["w1"][0:D, :], jnp.zeros((D, D), jnp.float32)], axis=1),
        jnp.concatenate([na["w1"][D:2 * D, :], na["w3"][0:D, :]], axis=1),
        jnp.concatenate([na["w1"][2 * D:3 * D, :], na["w3"][D:2 * D, :]], axis=1),
    ], axis=0)                                                    # (3D, 2D)
    na_b = jnp.concatenate([na["b1"], na["b3"]], axis=1)          # (1, 2D)
    gn, ge = params["g_node_attn"], params["g_edge_attn"]
    return {
        "we": params["edge"]["w"].astype(bf16), "be": params["edge"]["b"],
        "na_w": na_w.astype(bf16), "na_b": na_b, "na_w2": na["w2_flat"],
        "wn": params["node"]["w"].astype(bf16), "bn": params["node"]["b"],
        "gn_w": gn["w1"].astype(bf16), "gn_b": gn["b1"], "gn_w2": gn["w2_flat"],
        "ge_w": ge["w1"].astype(bf16), "ge_b": ge["b1"], "ge_w2": ge["w2_flat"],
        "wg": params["glob"]["w"].astype(bf16), "bg": params["glob"]["b"],
    }


# ----------------------------- pure-JAX reference ---------------------------
# Mirrors the module semantics with the same bf16-operand / f32-accumulate matmuls
# and bf16-rounded scatter rows as the kernel, so it validates the kernel logic tightly.

def _ref_forward(params, x, edge_index, edge_attr, u, node_batch, edge_batch):
    N, D = x.shape
    G = u.shape[0]
    H, hd = NUM_HEADS, HEAD_DIM
    row, col = edge_index[0], edge_index[1]
    bf16 = jnp.bfloat16

    def lin(a, w, b):
        return jnp.dot(a.astype(bf16), w.astype(bf16),
                       preferred_element_type=jnp.float32) + b[0]

    def head_logits(h, w2_flat):                       # h: (n, H, hd)
        return jnp.sum(h * w2_flat.reshape(1, H, hd), axis=-1)     # (n, H)

    def seg_softmax(lg, index, S):
        mx = jax.ops.segment_max(lg, index, num_segments=S)
        p = jnp.exp(lg - mx[index])
        dn = jax.ops.segment_sum(p, index, num_segments=S)[index] + 1e-16
        return p / dn

    def scatter_sum_bf16(w, index, S):
        # kernel scatters bf16-rounded rows with f32 accumulation on the MXU
        return jax.ops.segment_sum(w.astype(bf16).astype(jnp.float32), index,
                                   num_segments=S)

    def node_attn(p, q, kv, ke, index, S):
        h = jax.nn.leaky_relu(lin(jnp.concatenate([q, kv, ke], 1),
                                  p["w1"], p["b1"])).reshape(-1, H, hd)
        a = seg_softmax(head_logits(h, p["w2_flat"]), index, S)[..., None]
        v = lin(jnp.concatenate([kv, ke], 1), p["w3"], p["b3"]).reshape(-1, H, hd)
        return scatter_sum_bf16((a * v).reshape(-1, D), index, S)

    def glob_attn(p, q, k, index, S):
        h = jax.nn.leaky_relu(lin(jnp.concatenate([q, k], 1),
                                  p["w1"], p["b1"])).reshape(-1, H, hd)
        a = seg_softmax(head_logits(h, p["w2_flat"]), index, S)[..., None]
        return scatter_sum_bf16((a * k.reshape(-1, H, hd)).reshape(-1, D), index, S)

    global_edges = u[edge_batch]
    global_nodes = u[node_batch]
    edge_attr_new = lin(jnp.concatenate([edge_attr, x[row], x[col], global_edges], 1),
                        params["edge"]["w"], params["edge"]["b"])
    sent = node_attn(params["node_attn"], x[row], x[col], edge_attr_new, row, N)
    recv = node_attn(params["node_attn"], x[col], x[row], edge_attr_new, col, N)
    x_new = lin(jnp.concatenate([x, sent, recv, global_nodes], 1),
                params["node"]["w"], params["node"]["b"])
    node_attrs = glob_attn(params["g_node_attn"], global_nodes, x_new, node_batch, G)
    edge_attrs = glob_attn(params["g_edge_attn"], global_edges, edge_attr_new, edge_batch, G)
    u_new = lin(jnp.concatenate([u, node_attrs, edge_attrs], 1),
                params["glob"]["w"], params["glob"]["b"])
    return x_new, edge_attr_new, u_new, None


# ---------------------------------- main ------------------------------------

if __name__ == "__main__":
    D = EMB_DIM
    N, E, G = 8, 16, 2                      # nodes, edges, graphs

    key = jax.random.PRNGKey(0)
    kp, kx, ke, ku, kr0, kc0, kr1, kc1 = jax.random.split(key, 8)

    params = init_params(kp, D, NUM_HEADS)
    kparams = prepare_kernel_params(params, D)

    x = jax.random.normal(kx, (N, D), jnp.float32)
    edge_attr = jax.random.normal(ke, (E, D), jnp.float32)
    u = jax.random.normal(ku, (G, D), jnp.float32)

    # graph 0: nodes 0..3 / edges 0..7 ; graph 1: nodes 4..7 / edges 8..15
    row = jnp.concatenate([jax.random.randint(kr0, (E // 2,), 0, 4),
                           jax.random.randint(kr1, (E // 2,), 4, 8)]).astype(jnp.int32)
    col = jnp.concatenate([jax.random.randint(kc0, (E // 2,), 0, 4),
                           jax.random.randint(kc1, (E // 2,), 4, 8)]).astype(jnp.int32)
    edge_index = jnp.stack([row, col])
    node_batch = jnp.array([0] * 4 + [1] * 4, jnp.int32)
    edge_batch = jnp.array([0] * 8 + [1] * 8, jnp.int32)

    fwd = jax.jit(metalayer_forward)
    x_new, e_new, u_new, face = fwd(kparams, x, edge_index, edge_attr, u,
                                    node_batch, edge_batch)
    jax.block_until_ready((x_new, e_new, u_new))

    rx, re, ru, _ = _ref_forward(params, x, edge_index, edge_attr, u,
                                 node_batch, edge_batch)
    jax.block_until_ready((rx, re, ru))

    ok = (bool(jnp.allclose(x_new, rx, atol=3e-3, rtol=3e-3)) and
          bool(jnp.allclose(e_new, re, atol=3e-3, rtol=3e-3)) and
          bool(jnp.allclose(u_new, ru, atol=3e-3, rtol=3e-3)))
    if not ok:
        raise RuntimeError("Pallas MetaLayer output mismatch vs pure-JAX reference")
    print("KERNEL_OK")
</pallas_src>

<mosaic_0001>
module attributes {stable_mosaic.version = 11 : i64} {
  func.func @_metalayer_kernel(%arg0: i32, %arg1: memref<8x64xf32, #tpu.memory_space<vmem>>, %arg2: memref<16x64xf32, #tpu.memory_space<vmem>>, %arg3: memref<2x64xf32, #tpu.memory_space<vmem>>, %arg4: memref<16x1xi32, #tpu.memory_space<vmem>>, %arg5: memref<16x1xi32, #tpu.memory_space<vmem>>, %arg6: memref<8x1xi32, #tpu.memory_space<vmem>>, %arg7: memref<16x1xi32, #tpu.memory_space<vmem>>, %arg8: memref<256x64xbf16, #tpu.memory_space<vmem>>, %arg9: memref<1x64xf32, #tpu.memory_space<vmem>>, %arg10: memref<192x128xbf16, #tpu.memory_space<vmem>>, %arg11: memref<1x128xf32, #tpu.memory_space<vmem>>, %arg12: memref<1x64xf32, #tpu.memory_space<vmem>>, %arg13: memref<256x64xbf16, #tpu.memory_space<vmem>>, %arg14: memref<1x64xf32, #tpu.memory_space<vmem>>, %arg15: memref<128x64xbf16, #tpu.memory_space<vmem>>, %arg16: memref<1x64xf32, #tpu.memory_space<vmem>>, %arg17: memref<1x64xf32, #tpu.memory_space<vmem>>, %arg18: memref<128x64xbf16, #tpu.memory_space<vmem>>, %arg19: memref<1x64xf32, #tpu.memory_space<vmem>>, %arg20: memref<1x64xf32, #tpu.memory_space<vmem>>, %arg21: memref<192x64xbf16, #tpu.memory_space<vmem>>, %arg22: memref<1x64xf32, #tpu.memory_space<vmem>>, %arg23: memref<8x64xf32, #tpu.memory_space<vmem>>, %arg24: memref<16x64xf32, #tpu.memory_space<vmem>>, %arg25: memref<2x64xf32, #tpu.memory_space<vmem>>) attributes {dimension_semantics = [#tpu.dimension_semantics<arbitrary>], iteration_bounds = array<i64: 1>, scalar_prefetch = 0 : i64, scratch_operands = 0 : i64, tpu.core_type = #tpu.core_type<tc>, window_params = [{pipeline_mode = #tpu.pipeline_mode<synchronous>, transform_indices = @transform_0, window_bounds = array<i64: 8, 64>}, {pipeline_mode = #tpu.pipeline_mode<synchronous>, transform_indices = @transform_1, window_bounds = array<i64: 16, 64>}, {pipeline_mode = #tpu.pipeline_mode<synchronous>, transform_indices = @transform_2, window_bounds = array<i64: 2, 64>}, {pipeline_mode = #tpu.pipeline_mode<synchronous>, transform_indices = @transform_3, window_bounds = array<i64: 16, 1>}, {pipeline_mode = #tpu.pipeline_mode<synchronous>, transform_indices = @transform_4, window_bounds = array<i64: 16, 1>}, {pipeline_mode = #tpu.pipeline_mode<synchronous>, transform_indices = @transform_5, window_bounds = array<i64: 8, 1>}, {pipeline_mode = #tpu.pipeline_mode<synchronous>, transform_indices = @transform_6, window_bounds = array<i64: 16, 1>}, {pipeline_mode = #tpu.pipeline_mode<synchronous>, transform_indices = @transform_7, window_bounds = array<i64: 256, 64>}, {pipeline_mode = #tpu.pipeline_mode<synchronous>, transform_indices = @transform_8, window_bounds = array<i64: 1, 64>}, {pipeline_mode = #tpu.pipeline_mode<synchronous>, transform_indices = @transform_9, window_bounds = array<i64: 192, 128>}, {pipeline_mode = #tpu.pipeline_mode<synchronous>, transform_indices = @transform_10, window_bounds = array<i64: 1, 128>}, {pipeline_mode = #tpu.pipeline_mode<synchronous>, transform_indices = @transform_11, window_bounds = array<i64: 1, 64>}, {pipeline_mode = #tpu.pipeline_mode<synchronous>, transform_indices = @transform_12, window_bounds = array<i64: 256, 64>}, {pipeline_mode = #tpu.pipeline_mode<synchronous>, transform_indices = @transform_13, window_bounds = array<i64: 1, 64>}, {pipeline_mode = #tpu.pipeline_mode<synchronous>, transform_indices = @transform_14, window_bounds = array<i64: 128, 64>}, {pipeline_mode = #tpu.pipeline_mode<synchronous>, transform_indices = @transform_15, window_bounds = array<i64: 1, 64>}, {pipeline_mode = #tpu.pipeline_mode<synchronous>, transform_indices = @transform_16, window_bounds = array<i64: 1, 64>}, {pipeline_mode = #tpu.pipeline_mode<synchronous>, transform_indices = @transform_17, window_bounds = array<i64: 128, 64>}, {pipeline_mode = #tpu.pipeline_mode<synchronous>, transform_indices = @transform_18, window_bounds = array<i64: 1, 64>}, {pipeline_mode = #tpu.pipeline_mode<synchronous>, transform_indices = @transform_19, window_bounds = array<i64: 1, 64>}, {pipeline_mode = #tpu.pipeline_mode<synchronous>, transform_indices = @transform_20, window_bounds = array<i64: 192, 64>}, {pipeline_mode = #tpu.pipeline_mode<synchronous>, transform_indices = @transform_21, window_bounds = array<i64: 1, 64>}, {pipeline_mode = #tpu.pipeline_mode<synchronous>, transform_indices = @transform_22, window_bounds = array<i64: 8, 64>}, {pipeline_mode = #tpu.pipeline_mode<synchronous>, transform_indices = @transform_23, window_bounds = array<i64: 16, 64>}, {pipeline_mode = #tpu.pipeline_mode<synchronous>, transform_indices = @transform_24, window_bounds = array<i64: 2, 64>}]} {
    %c0 = arith.constant 0 : index
    %c0_0 = arith.constant 0 : index
    %0 = vector.load %arg1[%c0, %c0_0] : memref<8x64xf32, #tpu.memory_space<vmem>>, vector<8x64xf32>
    %1 = arith.truncf %0 : vector<8x64xf32> to vector<8x64xbf16>
    %c0_1 = arith.constant 0 : index
    %c0_2 = arith.constant 0 : index
    %2 = vector.load %arg2[%c0_1, %c0_2] : memref<16x64xf32, #tpu.memory_space<vmem>>, vector<16x64xf32>
    %3 = arith.truncf %2 : vector<16x64xf32> to vector<16x64xbf16>
    %c0_3 = arith.constant 0 : index
    %c0_4 = arith.constant 0 : index
    %4 = vector.load %arg3[%c0_3, %c0_4] : memref<2x64xf32, #tpu.memory_space<vmem>>, vector<2x64xf32>
    %5 = arith.truncf %4 : vector<2x64xf32> to vector<2x64xbf16>
    %6 = tpu.iota {dimensions = array<i32: 1>} : vector<1x8xi32>
    %7 = tpu.iota {dimensions = array<i32: 1>} : vector<1x2xi32>
    %c0_5 = arith.constant 0 : index
    %c0_6 = arith.constant 0 : index
    %8 = vector.load %arg4[%c0_5, %c0_6] : memref<16x1xi32, #tpu.memory_space<vmem>>, vector<16x1xi32>
    %9 = vector.broadcast %8 : vector<16x1xi32> to vector<16x8xi32>
    %10 = vector.broadcast %6 : vector<1x8xi32> to vector<16x8xi32>
    %11 = arith.cmpi eq, %9, %10 : vector<16x8xi32>
    %c0_7 = arith.constant 0 : index
    %c0_8 = arith.constant 0 : index
    %12 = vector.load %arg5[%c0_7, %c0_8] : memref<16x1xi32, #tpu.memory_space<vmem>>, vector<16x1xi32>
    %13 = vector.broadcast %12 : vector<16x1xi32> to vector<16x8xi32>
    %14 = vector.broadcast %6 : vector<1x8xi32> to vector<16x8xi32>
    %15 = arith.cmpi eq, %13, %14 : vector<16x8xi32>
    %c0_9 = arith.constant 0 : index
    %c0_10 = arith.constant 0 : index
    %16 = vector.load %arg6[%c0_9, %c0_10] : memref<8x1xi32, #tpu.memory_space<vmem>>, vector<8x1xi32>
    %17 = vector.broadcast %16 : vector<8x1xi32> to vector<8x2xi32>
    %18 = vector.broadcast %7 : vector<1x2xi32> to vector<8x2xi32>
    %19 = arith.cmpi eq, %17, %18 : vector<8x2xi32>
    %c0_11 = arith.constant 0 : index
    %c0_12 = arith.constant 0 : index
    %20 = vector.load %arg7[%c0_11, %c0_12] : memref<16x1xi32, #tpu.memory_space<vmem>>, vector<16x1xi32>
    %21 = vector.broadcast %20 : vector<16x1xi32> to vector<16x2xi32>
    %22 = vector.broadcast %7 : vector<1x2xi32> to vector<16x2xi32>
    %23 = arith.cmpi eq, %21, %22 : vector<16x2xi32>
    %24 = arith.extui %11 : vector<16x8xi1> to vector<16x8xi32>
    %25 = arith.sitofp %24 : vector<16x8xi32> to vector<16x8xf32>
    %26 = arith.truncf %25 : vector<16x8xf32> to vector<16x8xbf16>
    %27 = arith.extui %15 : vector<16x8xi1> to vector<16x8xi32>
    %28 = arith.sitofp %27 : vector<16x8xi32> to vector<16x8xf32>
    %29 = arith.truncf %28 : vector<16x8xf32> to vector<16x8xbf16>
    %30 = arith.extui %19 : vector<8x2xi1> to vector<8x2xi32>
    %31 = arith.sitofp %30 : vector<8x2xi32> to vector<8x2xf32>
    %32 = arith.truncf %31 : vector<8x2xf32> to vector<8x2xbf16>
    %33 = arith.extui %23 : vector<16x2xi1> to vector<16x2xi32>
    %34 = arith.sitofp %33 : vector<16x2xi32> to vector<16x2xf32>
    %35 = arith.truncf %34 : vector<16x2xf32> to vector<16x2xbf16>
    %cst = arith.constant dense<0.000000e+00> : vector<16x64xf32>
    %36 = tpu.matmul %26, %1, %cst {dimension_numbers = #tpu.dot_dimension_numbers<[1], [0], [0], [1], [0, 0, 1, 1], [], []>} : vector<16x8xbf16>, vector<8x64xbf16>, vector<16x64xf32> -> vector<16x64xf32>
    %37 = arith.truncf %36 : vector<16x64xf32> to vector<16x64xbf16>
    %cst_13 = arith.constant dense<0.000000e+00> : vector<16x64xf32>
    %38 = tpu.matmul %29, %1, %cst_13 {dimension_numbers = #tpu.dot_dimension_numbers<[1], [0], [0], [1], [0, 0, 1, 1], [], []>} : vector<16x8xbf16>, vector<8x64xbf16>, vector<16x64xf32> -> vector<16x64xf32>
    %39 = arith.truncf %38 : vector<16x64xf32> to vector<16x64xbf16>
    %cst_14 = arith.constant dense<0.000000e+00> : vector<16x64xf32>
    %40 = tpu.matmul %35, %5, %cst_14 {dimension_numbers = #tpu.dot_dimension_numbers<[1], [0], [0], [1], [0, 0, 1, 1], [], []>} : vector<16x2xbf16>, vector<2x64xbf16>, vector<16x64xf32> -> vector<16x64xf32>
    %41 = arith.truncf %40 : vector<16x64xf32> to vector<16x64xbf16>
    %cst_15 = arith.constant dense<0.000000e+00> : vector<8x64xf32>
    %42 = tpu.matmul %32, %5, %cst_15 {dimension_numbers = #tpu.dot_dimension_numbers<[1], [0], [0], [1], [0, 0, 1, 1], [], []>} : vector<8x2xbf16>, vector<2x64xbf16>, vector<8x64xf32> -> vector<8x64xf32>
    %43 = arith.truncf %42 : vector<8x64xf32> to vector<8x64xbf16>
    %44 = tpu.concatenate %3, %37, %39, %41 in 1 : vector<16x64xbf16>, vector<16x64xbf16>, vector<16x64xbf16>, vector<16x64xbf16> -> vector<16x256xbf16>
    %c0_16 = arith.constant 0 : index
    %c0_17 = arith.constant 0 : index
    %45 = vector.load %arg8[%c0_16, %c0_17] : memref<256x64xbf16, #tpu.memory_space<vmem>>, vector<256x64xbf16>
    %cst_18 = arith.constant dense<0.000000e+00> : vector<16x64xf32>
    %46 = tpu.matmul %44, %45, %cst_18 {dimension_numbers = #tpu.dot_dimension_numbers<[1], [0], [0], [1], [0, 0, 1, 1], [], []>} : vector<16x256xbf16>, vector<256x64xbf16>, vector<16x64xf32> -> vector<16x64xf32>
    %c0_19 = arith.constant 0 : index
    %c0_20 = arith.constant 0 : index
    %47 = vector.load %arg9[%c0_19, %c0_20] : memref<1x64xf32, #tpu.memory_space<vmem>>, vector<1x64xf32>
    %48 = vector.broadcast %47 : vector<1x64xf32> to vector<16x64xf32>
    %49 = arith.addf %46, %48 : vector<16x64xf32>
    %c0_21 = arith.constant 0 : index
    %c0_22 = arith.constant 0 : index
    %50 = vector.load %arg24[%c0_21, %c0_22] : memref<16x64xf32, #tpu.memory_space<vmem>>, vector<16x64xf32>
    tpu.vector_store %arg24[%c0_21, %c0_22], %49 {strides = array<i32>} : memref<16x64xf32, #tpu.memory_space<vmem>>, vector<16x64xf32>,
    %51 = arith.truncf %49 : vector<16x64xf32> to vector<16x64xbf16>
    %52 = tpu.concatenate %37, %39, %51 in 1 : vector<16x64xbf16>, vector<16x64xbf16>, vector<16x64xbf16> -> vector<16x192xbf16>
    %53 = tpu.concatenate %39, %37, %51 in 1 : vector<16x64xbf16>, vector<16x64xbf16>, vector<16x64xbf16> -> vector<16x192xbf16>
    %54 = tpu.concatenate %52, %53 in 0 : vector<16x192xbf16>, vector<16x192xbf16> -> vector<32x192xbf16>
    %c0_23 = arith.constant 0 : index
    %c0_24 = arith.constant 0 : index
    %55 = vector.load %arg10[%c0_23, %c0_24] : memref<192x128xbf16, #tpu.memory_space<vmem>>, vector<192x128xbf16>
    %cst_25 = arith.constant dense<0.000000e+00> : vector<32x128xf32>
    %56 = tpu.matmul %54, %55, %cst_25 {dimension_numbers = #tpu.dot_dimension_numbers<[1], [0], [0], [1], [0, 0, 1, 1], [], []>} : vector<32x192xbf16>, vector<192x128xbf16>, vector<32x128xf32> -> vector<32x128xf32>
    %c0_26 = arith.constant 0 : index
    %c0_27 = arith.constant 0 : index
    %57 = vector.load %arg11[%c0_26, %c0_27] : memref<1x128xf32, #tpu.memory_space<vmem>>, vector<1x128xf32>
    %58 = vector.broadcast %57 : vector<1x128xf32> to vector<32x128xf32>
    %59 = arith.addf %56, %58 : vector<32x128xf32>
    %60 = vector.extract_strided_slice %59 {offsets = [0, 0], sizes = [32, 64], strides = [1, 1]} : vector<32x128xf32> to vector<32x64xf32>
    %cst_28 = arith.constant 0.00999999977 : f32
    %61 = vector.broadcast %cst_28 : f32 to vector<32x64xf32>
    %62 = arith.mulf %61, %60 : vector<32x64xf32>
    %63 = arith.maximumf %60, %62 : vector<32x64xf32>
    %64 = vector.extract_strided_slice %59 {offsets = [0, 64], sizes = [32, 64], strides = [1, 1]} : vector<32x128xf32> to vector<32x64xf32>
    %c0_29 = arith.constant 0 : index
    %c0_30 = arith.constant 0 : index
    %65 = vector.load %arg12[%c0_29, %c0_30] : memref<1x64xf32, #tpu.memory_space<vmem>>, vector<1x64xf32>
    %66 = vector.broadcast %65 : vector<1x64xf32> to vector<32x64xf32>
    %67 = arith.mulf %63, %66 : vector<32x64xf32>
    %cst_31 = arith.constant dense<0.000000e+00> : vector<32xf32>
    %68 = vector.multi_reduction <add>, %67, %cst_31 [1] : vector<32x64xf32> to vector<32xf32>
    %69 = vector.shape_cast %68 : vector<32xf32> to vector<32x1xf32>
    %70 = vector.extract_strided_slice %69 {offsets = [0, 0], sizes = [16, 1], strides = [1, 1]} : vector<32x1xf32> to vector<16x1xf32>
    %cst_32 = arith.constant -1.000000e+30 : f32
    %71 = vector.shape_cast %70 : vector<16x1xf32> to vector<16x1xf32>
    %72 = vector.broadcast %71 : vector<16x1xf32> to vector<16x8xf32>
    %73 = vector.broadcast %cst_32 : f32 to vector<16x8xf32>
    %74 = arith.select %11, %72, %73 : vector<16x8xi1>, vector<16x8xf32>
    %cst_33 = arith.constant dense<0xFF800000> : vector<8xf32>
    %75 = vector.multi_reduction <maximumf>, %74, %cst_33 [0] : vector<16x8xf32> to vector<8xf32>
    %76 = vector.shape_cast %75 : vector<8xf32> to vector<1x8xf32>
    %cst_34 = arith.constant -1.000000e+30 : f32
    %77 = vector.shape_cast %76 : vector<1x8xf32> to vector<1x8xf32>
    %78 = vector.broadcast %77 : vector<1x8xf32> to vector<16x8xf32>
    %79 = vector.broadcast %cst_34 : f32 to vector<16x8xf32>
    %80 = arith.select %11, %78, %79 : vector<16x8xi1>, vector<16x8xf32>
    %cst_35 = arith.constant dense<0xFF800000> : vector<16xf32>
    %81 = vector.multi_reduction <maximumf>, %80, %cst_35 [1] : vector<16x8xf32> to vector<16xf32>
    %82 = vector.shape_cast %81 : vector<16xf32> to vector<16x1xf32>
    %83 = arith.subf %70, %82 : vector<16x1xf32>
    %84 = math.exp %83 : vector<16x1xf32>
    %cst_36 = arith.constant 0.000000e+00 : f32
    %85 = vector.shape_cast %84 : vector<16x1xf32> to vector<16x1xf32>
    %86 = vector.broadcast %85 : vector<16x1xf32> to vector<16x8xf32>
    %87 = vector.broadcast %cst_36 : f32 to vector<16x8xf32>
    %88 = arith.select %11, %86, %87 : vector<16x8xi1>, vector<16x8xf32>
    %cst_37 = arith.constant dense<0.000000e+00> : vector<8xf32>
    %89 = vector.multi_reduction <add>, %88, %cst_37 [0] : vector<16x8xf32> to vector<8xf32>
    %90 = vector.shape_cast %89 : vector<8xf32> to vector<1x8xf32>
    %cst_38 = arith.constant 0.000000e+00 : f32
    %91 = vector.shape_cast %90 : vector<1x8xf32> to vector<1x8xf32>
    %92 = vector.broadcast %91 : vector<1x8xf32> to vector<16x8xf32>
    %93 = vector.broadcast %cst_38 : f32 to vector<16x8xf32>
    %94 = arith.select %11, %92, %93 : vector<16x8xi1>, vector<16x8xf32>
    %cst_39 = arith.constant dense<0.000000e+00> : vector<16xf32>
    %95 = vector.multi_reduction <add>, %94, %cst_39 [1] : vector<16x8xf32> to vector<16xf32>
    %96 = vector.shape_cast %95 : vector<16xf32> to vector<16x1xf32>
    %cst_40 = arith.constant 1.000000e-16 : f32
    %97 = vector.broadcast %cst_40 : f32 to vector<16x1xf32>
    %98 = arith.addf %96, %97 : vector<16x1xf32>
    %99 = arith.divf %84, %98 : vector<16x1xf32>
    %100 = vector.shape_cast %99 : vector<16x1xf32> to vector<16x1xf32>
    %101 = vector.broadcast %100 : vector<16x1xf32> to vector<16x64xf32>
    %102 = vector.extract_strided_slice %69 {offsets = [16, 0], sizes = [16, 1], strides = [1, 1]} : vector<32x1xf32> to vector<16x1xf32>
    %cst_41 = arith.constant -1.000000e+30 : f32
    %103 = vector.shape_cast %102 : vector<16x1xf32> to vector<16x1xf32>
    %104 = vector.broadcast %103 : vector<16x1xf32> to vector<16x8xf32>
    %105 = vector.broadcast %cst_41 : f32 to vector<16x8xf32>
    %106 = arith.select %15, %104, %105 : vector<16x8xi1>, vector<16x8xf32>
    %cst_42 = arith.constant dense<0xFF800000> : vector<8xf32>
    %107 = vector.multi_reduction <maximumf>, %106, %cst_42 [0] : vector<16x8xf32> to vector<8xf32>
    %108 = vector.shape_cast %107 : vector<8xf32> to vector<1x8xf32>
    %cst_43 = arith.constant -1.000000e+30 : f32
    %109 = vector.shape_cast %108 : vector<1x8xf32> to vector<1x8xf32>
    %110 = vector.broadcast %109 : vector<1x8xf32> to vector<16x8xf32>
    %111 = vector.broadcast %cst_43 : f32 to vector<16x8xf32>
    %112 = arith.select %15, %110, %111 : vector<16x8xi1>, vector<16x8xf32>
    %cst_44 = arith.constant dense<0xFF800000> : vector<16xf32>
    %113 = vector.multi_reduction <maximumf>, %112, %cst_44 [1] : vector<16x8xf32> to vector<16xf32>
    %114 = vector.shape_cast %113 : vector<16xf32> to vector<16x1xf32>
    %115 = arith.subf %102, %114 : vector<16x1xf32>
    %116 = math.exp %115 : vector<16x1xf32>
    %cst_45 = arith.constant 0.000000e+00 : f32
    %117 = vector.shape_cast %116 : vector<16x1xf32> to vector<16x1xf32>
    %118 = vector.broadcast %117 : vector<16x1xf32> to vector<16x8xf32>
    %119 = vector.broadcast %cst_45 : f32 to vector<16x8xf32>
    %120 = arith.select %15, %118, %119 : vector<16x8xi1>, vector<16x8xf32>
    %cst_46 = arith.constant dense<0.000000e+00> : vector<8xf32>
    %121 = vector.multi_reduction <add>, %120, %cst_46 [0] : vector<16x8xf32> to vector<8xf32>
    %122 = vector.shape_cast %121 : vector<8xf32> to vector<1x8xf32>
    %cst_47 = arith.constant 0.000000e+00 : f32
    %123 = vector.shape_cast %122 : vector<1x8xf32> to vector<1x8xf32>
    %124 = vector.broadcast %123 : vector<1x8xf32> to vector<16x8xf32>
    %125 = vector.broadcast %cst_47 : f32 to vector<16x8xf32>
    %126 = arith.select %15, %124, %125 : vector<16x8xi1>, vector<16x8xf32>
    %cst_48 = arith.constant dense<0.000000e+00> : vector<16xf32>
    %127 = vector.multi_reduction <add>, %126, %cst_48 [1] : vector<16x8xf32> to vector<16xf32>
    %128 = vector.shape_cast %127 : vector<16xf32> to vector<16x1xf32>
    %cst_49 = arith.constant 1.000000e-16 : f32
    %129 = vector.broadcast %cst_49 : f32 to vector<16x1xf32>
    %130 = arith.addf %128, %129 : vector<16x1xf32>
    %131 = arith.divf %116, %130 : vector<16x1xf32>
    %132 = vector.shape_cast %131 : vector<16x1xf32> to vector<16x1xf32>
    %133 = vector.broadcast %132 : vector<16x1xf32> to vector<16x64xf32>
    %134 = vector.extract_strided_slice %64 {offsets = [0, 0], sizes = [16, 64], strides = [1, 1]} : vector<32x64xf32> to vector<16x64xf32>
    %135 = arith.mulf %101, %134 : vector<16x64xf32>
    %136 = arith.truncf %135 : vector<16x64xf32> to vector<16x64xbf16>
    %137 = vector.extract_strided_slice %64 {offsets = [16, 0], sizes = [16, 64], strides = [1, 1]} : vector<32x64xf32> to vector<16x64xf32>
    %138 = arith.mulf %133, %137 : vector<16x64xf32>
    %139 = arith.truncf %138 : vector<16x64xf32> to vector<16x64xbf16>
    %cst_50 = arith.constant 0.000000e+00 : bf16
    %140 = vector.broadcast %cst_50 : bf16 to vector<16x64xbf16>
    %141 = tpu.concatenate %136, %140 in 1 : vector<16x64xbf16>, vector<16x64xbf16> -> vector<16x128xbf16>
    %142 = tpu.concatenate %140, %139 in 1 : vector<16x64xbf16>, vector<16x64xbf16> -> vector<16x128xbf16>
    %143 = tpu.concatenate %141, %142 in 0 : vector<16x128xbf16>, vector<16x128xbf16> -> vector<32x128xbf16>
    %144 = tpu.concatenate %26, %29 in 0 : vector<16x8xbf16>, vector<16x8xbf16> -> vector<32x8xbf16>
    %cst_51 = arith.constant dense<0.000000e+00> : vector<8x128xf32>
    %145 = tpu.matmul %144, %143, %cst_51 {dimension_numbers = #tpu.dot_dimension_numbers<[0], [0], [1], [1], [0, 1, 1, 1], [], []>} : vector<32x8xbf16>, vector<32x128xbf16>, vector<8x128xf32> -> vector<8x128xf32>
    %146 = arith.truncf %145 : vector<8x128xf32> to vector<8x128xbf16>
    %147 = tpu.concatenate %1, %146, %43 in 1 : vector<8x64xbf16>, vector<8x128xbf16>, vector<8x64xbf16> -> vector<8x256xbf16>
    %c0_52 = arith.constant 0 : index
    %c0_53 = arith.constant 0 : index
    %148 = vector.load %arg13[%c0_52, %c0_53] : memref<256x64xbf16, #tpu.memory_space<vmem>>, vector<256x64xbf16>
    %cst_54 = arith.constant dense<0.000000e+00> : vector<8x64xf32>
    %149 = tpu.matmul %147, %148, %cst_54 {dimension_numbers = #tpu.dot_dimension_numbers<[1], [0], [0], [1], [0, 0, 1, 1], [], []>} : vector<8x256xbf16>, vector<256x64xbf16>, vector<8x64xf32> -> vector<8x64xf32>
    %c0_55 = arith.constant 0 : index
    %c0_56 = arith.constant 0 : index
    %150 = vector.load %arg14[%c0_55, %c0_56] : memref<1x64xf32, #tpu.memory_space<vmem>>, vector<1x64xf32>
    %151 = vector.broadcast %150 : vector<1x64xf32> to vector<8x64xf32>
    %152 = arith.addf %149, %151 : vector<8x64xf32>
    %c0_57 = arith.constant 0 : index
    %c0_58 = arith.constant 0 : index
    %153 = vector.load %arg23[%c0_57, %c0_58] : memref<8x64xf32, #tpu.memory_space<vmem>>, vector<8x64xf32>
    tpu.vector_store %arg23[%c0_57, %c0_58], %152 {strides = array<i32>} : memref<8x64xf32, #tpu.memory_space<vmem>>, vector<8x64xf32>,
    %154 = arith.truncf %152 : vector<8x64xf32> to vector<8x64xbf16>
    %155 = tpu.concatenate %43, %154 in 1 : vector<8x64xbf16>, vector<8x64xbf16> -> vector<8x128xbf16>
    %c0_59 = arith.constant 0 : index
    %c0_60 = arith.constant 0 : index
    %156 = vector.load %arg15[%c0_59, %c0_60] : memref<128x64xbf16, #tpu.memory_space<vmem>>, vector<128x64xbf16>
    %cst_61 = arith.constant dense<0.000000e+00> : vector<8x64xf32>
    %157 = tpu.matmul %155, %156, %cst_61 {dimension_numbers = #tpu.dot_dimension_numbers<[1], [0], [0], [1], [0, 0, 1, 1], [], []>} : vector<8x128xbf16>, vector<128x64xbf16>, vector<8x64xf32> -> vector<8x64xf32>
    %c0_62 = arith.constant 0 : index
    %c0_63 = arith.constant 0 : index
    %158 = vector.load %arg16[%c0_62, %c0_63] : memref<1x64xf32, #tpu.memory_space<vmem>>, vector<1x64xf32>
    %159 = vector.broadcast %158 : vector<1x64xf32> to vector<8x64xf32>
    %160 = arith.addf %157, %159 : vector<8x64xf32>
    %cst_64 = arith.constant 0.00999999977 : f32
    %161 = vector.broadcast %cst_64 : f32 to vector<8x64xf32>
    %162 = arith.mulf %161, %160 : vector<8x64xf32>
    %163 = arith.maximumf %160, %162 : vector<8x64xf32>
    %164 = tpu.concatenate %41, %51 in 1 : vector<16x64xbf16>, vector<16x64xbf16> -> vector<16x128xbf16>
    %c0_65 = arith.constant 0 : index
    %c0_66 = arith.constant 0 : index
    %165 = vector.load %arg18[%c0_65, %c0_66] : memref<128x64xbf16, #tpu.memory_space<vmem>>, vector<128x64xbf16>
    %cst_67 = arith.constant dense<0.000000e+00> : vector<16x64xf32>
    %166 = tpu.matmul %164, %165, %cst_67 {dimension_numbers = #tpu.dot_dimension_numbers<[1], [0], [0], [1], [0, 0, 1, 1], [], []>} : vector<16x128xbf16>, vector<128x64xbf16>, vector<16x64xf32> -> vector<16x64xf32>
    %c0_68 = arith.constant 0 : index
    %c0_69 = arith.constant 0 : index
    %167 = vector.load %arg19[%c0_68, %c0_69] : memref<1x64xf32, #tpu.memory_space<vmem>>, vector<1x64xf32>
    %168 = vector.broadcast %167 : vector<1x64xf32> to vector<16x64xf32>
    %169 = arith.addf %166, %168 : vector<16x64xf32>
    %cst_70 = arith.constant 0.00999999977 : f32
    %170 = vector.broadcast %cst_70 : f32 to vector<16x64xf32>
    %171 = arith.mulf %170, %169 : vector<16x64xf32>
    %172 = arith.maximumf %169, %171 : vector<16x64xf32>
    %c0_71 = arith.constant 0 : index
    %c0_72 = arith.constant 0 : index
    %173 = vector.load %arg17[%c0_71, %c0_72] : memref<1x64xf32, #tpu.memory_space<vmem>>, vector<1x64xf32>
    %174 = vector.broadcast %173 : vector<1x64xf32> to vector<8x64xf32>
    %175 = arith.mulf %163, %174 : vector<8x64xf32>
    %cst_73 = arith.constant dense<0.000000e+00> : vector<8xf32>
    %176 = vector.multi_reduction <add>, %175, %cst_73 [1] : vector<8x64xf32> to vector<8xf32>
    %177 = vector.shape_cast %176 : vector<8xf32> to vector<8x1xf32>
    %cst_74 = arith.constant -1.000000e+30 : f32
    %178 = vector.shape_cast %177 : vector<8x1xf32> to vector<8x1xf32>
    %179 = vector.broadcast %178 : vector<8x1xf32> to vector<8x2xf32>
    %180 = vector.broadcast %cst_74 : f32 to vector<8x2xf32>
    %181 = arith.select %19, %179, %180 : vector<8x2xi1>, vector<8x2xf32>
    %cst_75 = arith.constant dense<0xFF800000> : vector<2xf32>
    %182 = vector.multi_reduction <maximumf>, %181, %cst_75 [0] : vector<8x2xf32> to vector<2xf32>
    %183 = vector.shape_cast %182 : vector<2xf32> to vector<1x2xf32>
    %cst_76 = arith.constant -1.000000e+30 : f32
    %184 = vector.shape_cast %183 : vector<1x2xf32> to vector<1x2xf32>
    %185 = vector.broadcast %184 : vector<1x2xf32> to vector<8x2xf32>
    %186 = vector.broadcast %cst_76 : f32 to vector<8x2xf32>
    %187 = arith.select %19, %185, %186 : vector<8x2xi1>, vector<8x2xf32>
    %cst_77 = arith.constant dense<0xFF800000> : vector<8xf32>
    %188 = vector.multi_reduction <maximumf>, %187, %cst_77 [1] : vector<8x2xf32> to vector<8xf32>
    %189 = vector.shape_cast %188 : vector<8xf32> to vector<8x1xf32>
    %190 = arith.subf %177, %189 : vector<8x1xf32>
    %191 = math.exp %190 : vector<8x1xf32>
    %cst_78 = arith.constant 0.000000e+00 : f32
    %192 = vector.shape_cast %191 : vector<8x1xf32> to vector<8x1xf32>
    %193 = vector.broadcast %192 : vector<8x1xf32> to vector<8x2xf32>
    %194 = vector.broadcast %cst_78 : f32 to vector<8x2xf32>
    %195 = arith.select %19, %193, %194 : vector<8x2xi1>, vector<8x2xf32>
    %cst_79 = arith.constant dense<0.000000e+00> : vector<2xf32>
    %196 = vector.multi_reduction <add>, %195, %cst_79 [0] : vector<8x2xf32> to vector<2xf32>
    %197 = vector.shape_cast %196 : vector<2xf32> to vector<1x2xf32>
    %cst_80 = arith.constant 0.000000e+00 : f32
    %198 = vector.shape_cast %197 : vector<1x2xf32> to vector<1x2xf32>
    %199 = vector.broadcast %198 : vector<1x2xf32> to vector<8x2xf32>
    %200 = vector.broadcast %cst_80 : f32 to vector<8x2xf32>
    %201 = arith.select %19, %199, %200 : vector<8x2xi1>, vector<8x2xf32>
    %cst_81 = arith.constant dense<0.000000e+00> : vector<8xf32>
    %202 = vector.multi_reduction <add>, %201, %cst_81 [1] : vector<8x2xf32> to vector<8xf32>
    %203 = vector.shape_cast %202 : vector<8xf32> to vector<8x1xf32>
    %cst_82 = arith.constant 1.000000e-16 : f32
    %204 = vector.broadcast %cst_82 : f32 to vector<8x1xf32>
    %205 = arith.addf %203, %204 : vector<8x1xf32>
    %206 = arith.divf %191, %205 : vector<8x1xf32>
    %207 = vector.shape_cast %206 : vector<8x1xf32> to vector<8x1xf32>
    %208 = vector.broadcast %207 : vector<8x1xf32> to vector<8x64xf32>
    %c0_83 = arith.constant 0 : index
    %c0_84 = arith.constant 0 : index
    %209 = vector.load %arg20[%c0_83, %c0_84] : memref<1x64xf32, #tpu.memory_space<vmem>>, vector<1x64xf32>
    %210 = vector.broadcast %209 : vector<1x64xf32> to vector<16x64xf32>
    %211 = arith.mulf %172, %210 : vector<16x64xf32>
    %cst_85 = arith.constant dense<0.000000e+00> : vector<16xf32>
    %212 = vector.multi_reduction <add>, %211, %cst_85 [1] : vector<16x64xf32> to vector<16xf32>
    %213 = vector.shape_cast %212 : vector<16xf32> to vector<16x1xf32>
    %cst_86 = arith.constant -1.000000e+30 : f32
    %214 = vector.shape_cast %213 : vector<16x1xf32> to vector<16x1xf32>
    %215 = vector.broadcast %214 : vector<16x1xf32> to vector<16x2xf32>
    %216 = vector.broadcast %cst_86 : f32 to vector<16x2xf32>
    %217 = arith.select %23, %215, %216 : vector<16x2xi1>, vector<16x2xf32>
    %cst_87 = arith.constant dense<0xFF800000> : vector<2xf32>
    %218 = vector.multi_reduction <maximumf>, %217, %cst_87 [0] : vector<16x2xf32> to vector<2xf32>
    %219 = vector.shape_cast %218 : vector<2xf32> to vector<1x2xf32>
    %cst_88 = arith.constant -1.000000e+30 : f32
    %220 = vector.shape_cast %219 : vector<1x2xf32> to vector<1x2xf32>
    %221 = vector.broadcast %220 : vector<1x2xf32> to vector<16x2xf32>
    %222 = vector.broadcast %cst_88 : f32 to vector<16x2xf32>
    %223 = arith.select %23, %221, %222 : vector<16x2xi1>, vector<16x2xf32>
    %cst_89 = arith.constant dense<0xFF800000> : vector<16xf32>
    %224 = vector.multi_reduction <maximumf>, %223, %cst_89 [1] : vector<16x2xf32> to vector<16xf32>
    %225 = vector.shape_cast %224 : vector<16xf32> to vector<16x1xf32>
    %226 = arith.subf %213, %225 : vector<16x1xf32>
    %227 = math.exp %226 : vector<16x1xf32>
    %cst_90 = arith.constant 0.000000e+00 : f32
    %228 = vector.shape_cast %227 : vector<16x1xf32> to vector<16x1xf32>
    %229 = vector.broadcast %228 : vector<16x1xf32> to vector<16x2xf32>
    %230 = vector.broadcast %cst_90 : f32 to vector<16x2xf32>
    %231 = arith.select %23, %229, %230 : vector<16x2xi1>, vector<16x2xf32>
    %cst_91 = arith.constant dense<0.000000e+00> : vector<2xf32>
    %232 = vector.multi_reduction <add>, %231, %cst_91 [0] : vector<16x2xf32> to vector<2xf32>
    %233 = vector.shape_cast %232 : vector<2xf32> to vector<1x2xf32>
    %cst_92 = arith.constant 0.000000e+00 : f32
    %234 = vector.shape_cast %233 : vector<1x2xf32> to vector<1x2xf32>
    %235 = vector.broadcast %234 : vector<1x2xf32> to vector<16x2xf32>
    %236 = vector.broadcast %cst_92 : f32 to vector<16x2xf32>
    %237 = arith.select %23, %235, %236 : vector<16x2xi1>, vector<16x2xf32>
    %cst_93 = arith.constant dense<0.000000e+00> : vector<16xf32>
    %238 = vector.multi_reduction <add>, %237, %cst_93 [1] : vector<16x2xf32> to vector<16xf32>
    %239 = vector.shape_cast %238 : vector<16xf32> to vector<16x1xf32>
    %cst_94 = arith.constant 1.000000e-16 : f32
    %240 = vector.broadcast %cst_94 : f32 to vector<16x1xf32>
    %241 = arith.addf %239, %240 : vector<16x1xf32>
    %242 = arith.divf %227, %241 : vector<16x1xf32>
    %243 = vector.shape_cast %242 : vector<16x1xf32> to vector<16x1xf32>
    %244 = vector.broadcast %243 : vector<16x1xf32> to vector<16x64xf32>
    %245 = arith.mulf %208, %152 : vector<8x64xf32>
    %246 = arith.truncf %245 : vector<8x64xf32> to vector<8x64xbf16>
    %247 = arith.mulf %244, %49 : vector<16x64xf32>
    %248 = arith.truncf %247 : vector<16x64xf32> to vector<16x64xbf16>
    %cst_95 = arith.constant 0.000000e+00 : bf16
    %249 = vector.broadcast %cst_95 : bf16 to vector<8x64xbf16>
    %250 = tpu.concatenate %246, %249 in 1 : vector<8x64xbf16>, vector<8x64xbf16> -> vector<8x128xbf16>
    %cst_96 = arith.constant 0.000000e+00 : bf16
    %251 = vector.broadcast %cst_96 : bf16 to vector<16x64xbf16>
    %252 = tpu.concatenate %251, %248 in 1 : vector<16x64xbf16>, vector<16x64xbf16> -> vector<16x128xbf16>
    %253 = tpu.concatenate %250, %252 in 0 : vector<8x128xbf16>, vector<16x128xbf16> -> vector<24x128xbf16>
    %254 = tpu.concatenate %32, %35 in 0 : vector<8x2xbf16>, vector<16x2xbf16> -> vector<24x2xbf16>
    %cst_97 = arith.constant dense<0.000000e+00> : vector<2x128xf32>
    %255 = tpu.matmul %254, %253, %cst_97 {dimension_numbers = #tpu.dot_dimension_numbers<[0], [0], [1], [1], [0, 1, 1, 1], [], []>} : vector<24x2xbf16>, vector<24x128xbf16>, vector<2x128xf32> -> vector<2x128xf32>
    %256 = arith.truncf %255 : vector<2x128xf32> to vector<2x128xbf16>
    %257 = tpu.concatenate %5, %256 in 1 : vector<2x64xbf16>, vector<2x128xbf16> -> vector<2x192xbf16>
    %c0_98 = arith.constant 0 : index
    %c0_99 = arith.constant 0 : index
    %258 = vector.load %arg21[%c0_98, %c0_99] : memref<192x64xbf16, #tpu.memory_space<vmem>>, vector<192x64xbf16>
    %cst_100 = arith.constant dense<0.000000e+00> : vector<2x64xf32>
    %259 = tpu.matmul %257, %258, %cst_100 {dimension_numbers = #tpu.dot_dimension_numbers<[1], [0], [0], [1], [0, 0, 1, 1], [], []>} : vector<2x192xbf16>, vector<192x64xbf16>, vector<2x64xf32> -> vector<2x64xf32>
    %c0_101 = arith.constant 0 : index
    %c0_102 = arith.constant 0 : index
    %260 = vector.load %arg22[%c0_101, %c0_102] : memref<1x64xf32, #tpu.memory_space<vmem>>, vector<1x64xf32>
    %261 = vector.broadcast %260 : vector<1x64xf32> to vector<2x64xf32>
    %262 = arith.addf %259, %261 : vector<2x64xf32>
    %c0_103 = arith.constant 0 : index
    %c0_104 = arith.constant 0 : index
    %263 = vector.load %arg25[%c0_103, %c0_104] : memref<2x64xf32, #tpu.memory_space<vmem>>, vector<2x64xf32>
    tpu.vector_store %arg25[%c0_103, %c0_104], %262 {strides = array<i32>} : memref<2x64xf32, #tpu.memory_space<vmem>>, vector<2x64xf32>,
    return
  }
  func.func @transform_0(%arg0: i32) -> (i32, i32) {
    %c0_i32 = arith.constant 0 : i32
    %c0_i32_0 = arith.constant 0 : i32
    %c0_i32_1 = arith.constant 0 : i32
    return %c0_i32, %c0_i32_0 : i32, i32
  }
  func.func @transform_1(%arg0: i32) -> (i32, i32) {
    %c0_i32 = arith.constant 0 : i32
    %c0_i32_0 = arith.constant 0 : i32
    %c0_i32_1 = arith.constant 0 : i32
    return %c0_i32, %c0_i32_0 : i32, i32
  }
  func.func @transform_2(%arg0: i32) -> (i32, i32) {
    %c0_i32 = arith.constant 0 : i32
    %c0_i32_0 = arith.constant 0 : i32
    %c0_i32_1 = arith.constant 0 : i32
    return %c0_i32, %c0_i32_0 : i32, i32
  }
  func.func @transform_3(%arg0: i32) -> (i32, i32) {
    %c0_i32 = arith.constant 0 : i32
    %c0_i32_0 = arith.constant 0 : i32
    %c0_i32_1 = arith.constant 0 : i32
    return %c0_i32, %c0_i32_0 : i32, i32
  }
  func.func @transform_4(%arg0: i32) -> (i32, i32) {
    %c0_i32 = arith.constant 0 : i32
    %c0_i32_0 = arith.constant 0 : i32
    %c0_i32_1 = arith.constant 0 : i32
    return %c0_i32, %c0_i32_0 : i32, i32
  }
  func.func @transform_5(%arg0: i32) -> (i32, i32) {
    %c0_i32 = arith.constant 0 : i32
    %c0_i32_0 = arith.constant 0 : i32
    %c0_i32_1 = arith.constant 0 : i32
    return %c0_i32, %c0_i32_0 : i32, i32
  }
  func.func @transform_6(%arg0: i32) -> (i32, i32) {
    %c0_i32 = arith.constant 0 : i32
    %c0_i32_0 = arith.constant 0 : i32
    %c0_i32_1 = arith.constant 0 : i32
    return %c0_i32, %c0_i32_0 : i32, i32
  }
  func.func @transform_7(%arg0: i32) -> (i32, i32) {
    %c0_i32 = arith.constant 0 : i32
    %c0_i32_0 = arith.constant 0 : i32
    %c0_i32_1 = arith.constant 0 : i32
    return %c0_i32, %c0_i32_0 : i32, i32
  }
  func.func @transform_8(%arg0: i32) -> (i32, i32) {
    %c0_i32 = arith.constant 0 : i32
    %c0_i32_0 = arith.constant 0 : i32
    %c0_i32_1 = arith.constant 0 : i32
    return %c0_i32, %c0_i32_0 : i32, i32
  }
  func.func @transform_9(%arg0: i32) -> (i32, i32) {
    %c0_i32 = arith.constant 0 : i32
    %c0_i32_0 = arith.constant 0 : i32
    %c0_i32_1 = arith.constant 0 : i32
    return %c0_i32, %c0_i32_0 : i32, i32
  }
  func.func @transform_10(%arg0: i32) -> (i32, i32) {
    %c0_i32 = arith.constant 0 : i32
    %c0_i32_0 = arith.constant 0 : i32
    %c0_i32_1 = arith.constant 0 : i32
    return %c0_i32, %c0_i32_0 : i32, i32
  }
  func.func @transform_11(%arg0: i32) -> (i32, i32) {
    %c0_i32 = arith.constant 0 : i32
    %c0_i32_0 = arith.constant 0 : i32
    %c0_i32_1 = arith.constant 0 : i32
    return %c0_i32, %c0_i32_0 : i32, i32
  }
  func.func @transform_12(%arg0: i32) -> (i32, i32) {
    %c0_i32 = arith.constant 0 : i32
    %c0_i32_0 = arith.constant 0 : i32
    %c0_i32_1 = arith.constant 0 : i32
    return %c0_i32, %c0_i32_0 : i32, i32
  }
  func.func @transform_13(%arg0: i32) -> (i32, i32) {
    %c0_i32 = arith.constant 0 : i32
    %c0_i32_0 = arith.constant 0 : i32
    %c0_i32_1 = arith.constant 0 : i32
    return %c0_i32, %c0_i32_0 : i32, i32
  }
  func.func @transform_14(%arg0: i32) -> (i32, i32) {
    %c0_i32 = arith.constant 0 : i32
    %c0_i32_0 = arith.constant 0 : i32
    %c0_i32_1 = arith.constant 0 : i32
    return %c0_i32, %c0_i32_0 : i32, i32
  }
  func.func @transform_15(%arg0: i32) -> (i32, i32) {
    %c0_i32 = arith.constant 0 : i32
    %c0_i32_0 = arith.constant 0 : i32
    %c0_i32_1 = arith.constant 0 : i32
    return %c0_i32, %c0_i32_0 : i32, i32
  }
  func.func @transform_16(%arg0: i32) -> (i32, i32) {
    %c0_i32 = arith.constant 0 : i32
    %c0_i32_0 = arith.constant 0 : i32
    %c0_i32_1 = arith.constant 0 : i32
    return %c0_i32, %c0_i32_0 : i32, i32
  }
  func.func @transform_17(%arg0: i32) -> (i32, i32) {
    %c0_i32 = arith.constant 0 : i32
    %c0_i32_0 = arith.constant 0 : i32
    %c0_i32_1 = arith.constant 0 : i32
    return %c0_i32, %c0_i32_0 : i32, i32
  }
  func.func @transform_18(%arg0: i32) -> (i32, i32) {
    %c0_i32 = arith.constant 0 : i32
    %c0_i32_0 = arith.constant 0 : i32
    %c0_i32_1 = arith.constant 0 : i32
    return %c0_i32, %c0_i32_0 : i32, i32
  }
  func.func @transform_19(%arg0: i32) -> (i32, i32) {
    %c0_i32 = arith.constant 0 : i32
    %c0_i32_0 = arith.constant 0 : i32
    %c0_i32_1 = arith.constant 0 : i32
    return %c0_i32, %c0_i32_0 : i32, i32
  }
  func.func @transform_20(%arg0: i32) -> (i32, i32) {
    %c0_i32 = arith.constant 0 : i32
    %c0_i32_0 = arith.constant 0 : i32
    %c0_i32_1 = arith.constant 0 : i32
    return %c0_i32, %c0_i32_0 : i32, i32
  }
  func.func @transform_21(%arg0: i32) -> (i32, i32) {
    %c0_i32 = arith.constant 0 : i32
    %c0_i32_0 = arith.constant 0 : i32
    %c0_i32_1 = arith.constant 0 : i32
    return %c0_i32, %c0_i32_0 : i32, i32
  }
  func.func @transform_22(%arg0: i32) -> (i32, i32) {
    %c0_i32 = arith.constant 0 : i32
    %c0_i32_0 = arith.constant 0 : i32
    %c0_i32_1 = arith.constant 0 : i32
    return %c0_i32, %c0_i32_0 : i32, i32
  }
  func.func @transform_23(%arg0: i32) -> (i32, i32) {
    %c0_i32 = arith.constant 0 : i32
    %c0_i32_0 = arith.constant 0 : i32
    %c0_i32_1 = arith.constant 0 : i32
    return %c0_i32, %c0_i32_0 : i32, i32
  }
  func.func @transform_24(%arg0: i32) -> (i32, i32) {
    %c0_i32 = arith.constant 0 : i32
    %c0_i32_0 = arith.constant 0 : i32
    %c0_i32_1 = arith.constant 0 : i32
    return %c0_i32, %c0_i32_0 : i32, i32
  }
}

</mosaic_0001>

<llo_original>
// kernel: metalayer_forward.1
$region0: #{metalayer_forward.1}
  #allocation0 [shape = 'u32[]', space=smem, size = 0x4, offset = 0x4, fixed_abs, tag = 'smem constant byte address 0x4 - core index']
  #allocation1 [shape = 'u32[144,128]{1,0:T(1,128)}', space=vmem, size = 0x12000, scoped, tag = 'internal scratch']
  %s0 = inlined_call_operand.vmem [shape: f32[8,64], index: 0, kind: input, shape index: {}]
  %s1 = inlined_call_operand.vmem [shape: f32[16,64], index: 1, kind: input, shape index: {}]
  %s2 = inlined_call_operand.vmem [shape: f32[2,64], index: 2, kind: input, shape index: {}]
  %s3 = inlined_call_operand.vmem [shape: s32[16,1], index: 3, kind: input, shape index: {}]
  %s4 = inlined_call_operand.vmem [shape: s32[16,1], index: 4, kind: input, shape index: {}]
  %s5 = inlined_call_operand.vmem [shape: s32[8,1], index: 5, kind: input, shape index: {}]
  %s6 = inlined_call_operand.vmem [shape: s32[16,1], index: 6, kind: input, shape index: {}]
  %s7 = inlined_call_operand.vmem [shape: bf16[256,64], index: 7, kind: input, shape index: {}]
  %s8 = inlined_call_operand.vmem [shape: f32[1,64], index: 8, kind: input, shape index: {}]
  %s9 = inlined_call_operand.vmem [shape: bf16[192,128], index: 9, kind: input, shape index: {}]
  %s10 = inlined_call_operand.vmem [shape: f32[1,128], index: 10, kind: input, shape index: {}]
  %s11 = inlined_call_operand.vmem [shape: f32[1,64], index: 11, kind: input, shape index: {}]
  %s12 = inlined_call_operand.vmem [shape: bf16[256,64], index: 12, kind: input, shape index: {}]
  %s13 = inlined_call_operand.vmem [shape: f32[1,64], index: 13, kind: input, shape index: {}]
  %s14 = inlined_call_operand.vmem [shape: bf16[128,64], index: 14, kind: input, shape index: {}]
  %s15 = inlined_call_operand.vmem [shape: f32[1,64], index: 15, kind: input, shape index: {}]
  %s16 = inlined_call_operand.vmem [shape: f32[1,64], index: 16, kind: input, shape index: {}]
  %s17 = inlined_call_operand.vmem [shape: bf16[128,64], index: 17, kind: input, shape index: {}]
  %s18 = inlined_call_operand.vmem [shape: f32[1,64], index: 18, kind: input, shape index: {}]
  %s19 = inlined_call_operand.vmem [shape: f32[1,64], index: 19, kind: input, shape index: {}]
  %s20 = inlined_call_operand.vmem [shape: bf16[192,64], index: 20, kind: input, shape index: {}]
  %s21 = inlined_call_operand.vmem [shape: f32[1,64], index: 21, kind: input, shape index: {}]
  %s22 = inlined_call_operand.hbm [shape: f32[8,64], index: 22, kind: output, shape index: {0}]
  %s23 = inlined_call_operand.hbm [shape: f32[16,64], index: 23, kind: output, shape index: {1}]
  %s24 = inlined_call_operand.hbm [shape: f32[2,64], index: 24, kind: output, shape index: {2}]
  %25 = xla_tuple %s22, %s23, %s24
  %s26 = sld [smem:[#allocation0]]
  $region114: #{metalayer_forward.1} parent=0
    _
  %s28 = ssub.s32 1, %s26
  %s29 = scalar_select 0, %s28, %s26
  $region1: #{metalayer_forward.1} parent=0
    #allocation2 [shape = 'u8[4096]{0}', space=vmem, size = 0x1000, scoped, tag = 'output window, operand 0, single buffered']
    #allocation3 [shape = 's32[1]{0}', space=sflag, size = 0x4, scoped, tag = 'scoped memory for metalayer_forward.1']
    #allocation4 [shape = 'u8[8192]{0}', space=vmem, size = 0x2000, scoped, tag = 'output window, operand 1, single buffered']
    #allocation5 [shape = 's32[1]{0}', space=sflag, size = 0x4, scoped, tag = 'scoped memory for metalayer_forward.1']
    #allocation6 [shape = 'u8[1024]{0}', space=vmem, size = 0x400, scoped, tag = 'output window, operand 2, single buffered']
    %30 = vsyncpa [#allocation3], 0
    %31 = vsyncpa [#allocation5], 0
    // Predicated region
    $region2: #{metalayer_forward.1} parent=1 // pred_check
      _
    $region3: #{metalayer_forward.1} parent=1 // pred_check_branch
      %33 = sbr.rel (0) target = $region5
    $region4: #{metalayer_forward.1} parent=1 // pred_region
      _
    $region5: #{metalayer_forward.1} parent=1 // pred_fallthru
      _
    // Predicated region
    $region6: #{metalayer_forward.1} parent=1 // pred_check
      _
    $region7: #{metalayer_forward.1} parent=1 // pred_check_branch
      %35 = sbr.rel (0) target = $region9
    $region8: #{metalayer_forward.1} parent=1 // pred_region
      _
    $region9: #{metalayer_forward.1} parent=1 // pred_fallthru
      _
    // Predicated region
    $region10: #{metalayer_forward.1} parent=1 // pred_check
      _
    $region11: #{metalayer_forward.1} parent=1 // pred_check_branch
      %37 = sbr.rel (0) target = $region13
    $region12: #{metalayer_forward.1} parent=1 // pred_region
      _
    $region13: #{metalayer_forward.1} parent=1 // pred_fallthru
      _
    // Predicated region
    $region14: #{metalayer_forward.1} parent=1 // pred_check
      _
    $region15: #{metalayer_forward.1} parent=1 // pred_check_branch
      %39 = sbr.rel (0) target = $region17
    $region16: #{metalayer_forward.1} parent=1 // pred_region
      _
    $region17: #{metalayer_forward.1} parent=1 // pred_fallthru
      _
    // Predicated region
    $region18: #{metalayer_forward.1} parent=1 // pred_check
      _
    $region19: #{metalayer_forward.1} parent=1 // pred_check_branch
      %41 = sbr.rel (0) target = $region21
    $region20: #{metalayer_forward.1} parent=1 // pred_region
      _
    $region21: #{metalayer_forward.1} parent=1 // pred_fallthru
      _
    // Predicated region
    $region22: #{metalayer_forward.1} parent=1 // pred_check
      _
    $region23: #{metalayer_forward.1} parent=1 // pred_check_branch
      %43 = sbr.rel (0) target = $region25
    $region24: #{metalayer_forward.1} parent=1 // pred_region
      _
    $region25: #{metalayer_forward.1} parent=1 // pred_fallthru
      _
    // Predicated region
    $region26: #{metalayer_forward.1} parent=1 // pred_check
      _
    $region27: #{metalayer_forward.1} parent=1 // pred_check_branch
      %45 = sbr.rel (0) target = $region29
    $region28: #{metalayer_forward.1} parent=1 // pred_region
      _
    $region29: #{metalayer_forward.1} parent=1 // pred_fallthru
      _
    // Predicated region
    $region30: #{metalayer_forward.1} parent=1 // pred_check
      _
    $region31: #{metalayer_forward.1} parent=1 // pred_check_branch
      %47 = sbr.rel (0) target = $region33
    $region32: #{metalayer_forward.1} parent=1 // pred_region
      _
    $region33: #{metalayer_forward.1} parent=1 // pred_fallthru
      _
    // Predicated region
    $region34: #{metalayer_forward.1} parent=1 // pred_check
      _
    $region35: #{metalayer_forward.1} parent=1 // pred_check_branch
      %49 = sbr.rel (0) target = $region37
    $region36: #{metalayer_forward.1} parent=1 // pred_region
      _
    $region37: #{metalayer_forward.1} parent=1 // pred_fallthru
      _
    // Predicated region
    $region38: #{metalayer_forward.1} parent=1 // pred_check
      _
    $region39: #{metalayer_forward.1} parent=1 // pred_check_branch
      %51 = sbr.rel (0) target = $region41
    $region40: #{metalayer_forward.1} parent=1 // pred_region
      _
    $region41: #{metalayer_forward.1} parent=1 // pred_fallthru
      _
    // Predicated region
    $region42: #{metalayer_forward.1} parent=1 // pred_check
      _
    $region43: #{metalayer_forward.1} parent=1 // pred_check_branch
      %53 = sbr.rel (0) target = $region45
    $region44: #{metalayer_forward.1} parent=1 // pred_region
      _
    $region45: #{metalayer_forward.1} parent=1 // pred_fallthru
      _
    // Predicated region
    $region46: #{metalayer_forward.1} parent=1 // pred_check
      _
    $region47: #{metalayer_forward.1} parent=1 // pred_check_branch
      %55 = sbr.rel (0) target = $region49
    $region48: #{metalayer_forward.1} parent=1 // pred_region
      _
    $region49: #{metalayer_forward.1} parent=1 // pred_fallthru
      _
    // Predicated region
    $region50: #{metalayer_forward.1} parent=1 // pred_check
      _
    $region51: #{metalayer_forward.1} parent=1 // pred_check_branch
      %57 = sbr.rel (0) target = $region53
    $region52: #{metalayer_forward.1} parent=1 // pred_region
      _
    $region53: #{metalayer_forward.1} parent=1 // pred_fallthru
      _
    // Predicated region
    $region54: #{metalayer_forward.1} parent=1 // pred_check
      _
    $region55: #{metalayer_forward.1} parent=1 // pred_check_branch
      %59 = sbr.rel (0) target = $region57
    $region56: #{metalayer_forward.1} parent=1 // pred_region
      _
    $region57: #{metalayer_forward.1} parent=1 // pred_fallthru
      _
    // Predicated region
    $region58: #{metalayer_forward.1} parent=1 // pred_check
      _
    $region59: #{metalayer_forward.1} parent=1 // pred_check_branch
      %61 = sbr.rel (0) target = $region61
    $region60: #{metalayer_forward.1} parent=1 // pred_region
      _
    $region61: #{metalayer_forward.1} parent=1 // pred_fallthru
      _
    // Predicated region
    $region62: #{metalayer_forward.1} parent=1 // pred_check
      _
    $region63: #{metalayer_forward.1} parent=1 // pred_check_branch
      %63 = sbr.rel (0) target = $region65
    $region64: #{metalayer_forward.1} parent=1 // pred_region
      _
    $region65: #{metalayer_forward.1} parent=1 // pred_fallthru
      _
    // Predicated region
    $region66: #{metalayer_forward.1} parent=1 // pred_check
      _
    $region67: #{metalayer_forward.1} parent=1 // pred_check_branch
      %65 = sbr.rel (0) target = $region69
    $region68: #{metalayer_forward.1} parent=1 // pred_region
      _
    $region69: #{metalayer_forward.1} parent=1 // pred_fallthru
      _
    // Predicated region
    $region70: #{metalayer_forward.1} parent=1 // pred_check
      _
    $region71: #{metalayer_forward.1} parent=1 // pred_check_branch
      %67 = sbr.rel (0) target = $region73
    $region72: #{metalayer_forward.1} parent=1 // pred_region
      _
    $region73: #{metalayer_forward.1} parent=1 // pred_fallthru
      _
    // Predicated region
    $region74: #{metalayer_forward.1} parent=1 // pred_check
      _
    $region75: #{metalayer_forward.1} parent=1 // pred_check_branch
      %69 = sbr.rel (0) target = $region77
    $region76: #{metalayer_forward.1} parent=1 // pred_region
      _
    $region77: #{metalayer_forward.1} parent=1 // pred_fallthru
      _
    // Predicated region
    $region78: #{metalayer_forward.1} parent=1 // pred_check
      _
    $region79: #{metalayer_forward.1} parent=1 // pred_check_branch
      %71 = sbr.rel (0) target = $region81
    $region80: #{metalayer_forward.1} parent=1 // pred_region
      _
    $region81: #{metalayer_forward.1} parent=1 // pred_fallthru
      _
    // Predicated region
    $region82: #{metalayer_forward.1} parent=1 // pred_check
      _
    $region83: #{metalayer_forward.1} parent=1 // pred_check_branch
      %73 = sbr.rel (0) target = $region85
    $region84: #{metalayer_forward.1} parent=1 // pred_region
      _
    $region85: #{metalayer_forward.1} parent=1 // pred_fallthru
      _
    // Predicated region
    $region86: #{metalayer_forward.1} parent=1 // pred_check
      _
    $region87: #{metalayer_forward.1} parent=1 // pred_check_branch
      %75 = sbr.rel (0) target = $region89
    $region88: #{metalayer_forward.1} parent=1 // pred_region
      _
    $region89: #{metalayer_forward.1} parent=1 // pred_fallthru
      _
    %v77 = vld [vmem:[%s0] sm:$0xff]
    %v78 = vpack.c.bf16 %v77, %v77
    %v79 = vld [vmem:[%s1] sm:$0xff]
    %v80 = vld [vmem:[%s1 + $0x8] sm:$0xff]
    %v81 = vpack.c.bf16 %v80, %v79
    %v82 = vld [vmem:[%s2] sm:$0x3]
    %v83 = vpack.c.bf16 %v82, %v82
    %v84 = vlaneseq
    %v85 = vand.u32 %v84, 127
    %v86 = vld [vmem:[%s3] sm:$0xff]
    %v87 = vld [vmem:[%s3 + $0x8] sm:$0xff]
    %88 = vset.pattern.permute.xlu0 0
    %89 = vperm.xlu0 %88, %v86
    %v90 = vpop.permute.xlu0 %89
    %91 = vset.pattern.permute.xlu0 0
    %92 = vperm.xlu0 %91, %v87
    %v93 = vpop.permute.xlu0 %92
    %vm94 = vcmp.eq.s32.totalorder %v90, %v85
    %vm95 = vcmp.eq.s32.totalorder %v93, %v85
    %v96 = vld [vmem:[%s4] sm:$0xff]
    %v97 = vld [vmem:[%s4 + $0x8] sm:$0xff]
    %98 = vset.pattern.permute.xlu0 0
    %99 = vperm.xlu0 %98, %v96
    %v100 = vpop.permute.xlu0 %99
    %101 = vset.pattern.permute.xlu0 0
    %102 = vperm.xlu0 %101, %v97
    %v103 = vpop.permute.xlu0 %102
    %vm104 = vcmp.eq.s32.totalorder %v100, %v85
    %vm105 = vcmp.eq.s32.totalorder %v103, %v85
    %v106 = vld [vmem:[%s5] sm:$0xff]
    %107 = vset.pattern.permute.xlu0 0
    %108 = vperm.xlu0 %107, %v106
    %v109 = vpop.permute.xlu0 %108
    %vm110 = vcmp.eq.s32.totalorder %v109, %v85
    %v111 = vld [vmem:[%s6] sm:$0xff]
    %v112 = vld [vmem:[%s6 + $0x8] sm:$0xff]
    %113 = vset.pattern.permute.xlu0 0
    %114 = vperm.xlu0 %113, %v111
    %v115 = vpop.permute.xlu0 %114
    %116 = vset.pattern.permute.xlu0 0
    %117 = vperm.xlu0 %116, %v112
    %v118 = vpop.permute.xlu0 %117
    %vm119 = vcmp.eq.s32.totalorder %v115, %v85
    %vm120 = vcmp.eq.s32.totalorder %v118, %v85
    %v121 = vsel %vm94, 1, 0
    %v122 = vsel %vm95, 1, 0
    %v123 = vcvt.s32.f32 %v121
    %v124 = vcvt.s32.f32 %v122
    %v125 = vpack.c.bf16 %v124, %v123
    %v126 = vsel %vm104, 1, 0
    %v127 = vsel %vm105, 1, 0
    %v128 = vcvt.s32.f32 %v126
    %v129 = vcvt.s32.f32 %v127
    %v130 = vpack.c.bf16 %v129, %v128
    %v131 = vsel %vm110, 1, 0
    %v132 = vcvt.s32.f32 %v131
    %v133 = vpack.c.bf16 %v132, %v132
    %v134 = vsel %vm119, 1, 0
    %v135 = vsel %vm120, 1, 0
    %v136 = vcvt.s32.f32 %v134
    %v137 = vcvt.s32.f32 %v135
    %v138 = vpack.c.bf16 %v137, %v136
    %vm139 = vcmask 64512
    %v141 = vsel %vm139, %v125, 0
    %vm143 = vcmask 1043456
    %v145 = vsel %vm143, %v78, 0
    %147 = vmatprep.subr.bf16.mxu0 0
    %148 = vmatpush1.bf16.msra.mxu0 %v145
    %149 = vmatprep.subr.bf16.mxu0 0
    %150 = vmatpush1.bf16.msra.mxu0 0
    %151 = vmatprep.subr.bf16.mxu0 0
    %152 = vmatpush1.bf16.msra.mxu0 0
    %153 = vmatprep.subr.bf16.mxu0 0
    %154 = vmatpush1.bf16.msra.mxu0 0
    %155 = vmatprep.subr.bf16.mxu0 0
    %156 = vmatpush1.bf16.msra.mxu0 0
    %157 = vmatprep.subr.bf16.mxu0 0
    %158 = vmatpush1.bf16.msra.mxu0 0
    %159 = vmatprep.subr.bf16.mxu0 0
    %160 = vmatpush1.bf16.msra.mxu0 0
    %161 = vmatprep.subr.bf16.mxu0 0
    %162 = vmatpush1.bf16.msra.mxu0 0
    %163 = vmatprep.subr.bf16.mxu0 0
    %164 = vmatpush1.bf16.msra.mxu0 0
    %165 = vmatprep.subr.bf16.mxu0 0
    %166 = vmatpush1.bf16.msra.mxu0 0
    %167 = vmatprep.subr.bf16.mxu0 0
    %168 = vmatpush1.bf16.msra.mxu0 0
    %169 = vmatprep.subr.bf16.mxu0 0
    %170 = vmatpush1.bf16.msra.mxu0 0
    %171 = vmatprep.subr.bf16.mxu0 0
    %172 = vmatpush1.bf16.msra.mxu0 0
    %173 = vmatprep.subr.bf16.mxu0 0
    %174 = vmatpush1.bf16.msra.mxu0 0
    %175 = vmatprep.subr.bf16.mxu0 0
    %176 = vmatpush1.bf16.msra.mxu0 0
    %177 = vmatprep.subr.bf16.mxu0 0
    %178 = vmatpush1.bf16.msra.mxu0 0
    %179 = vmatprep.mubr.bf16.mxu0 0
    %180 = vmatmul.mubr.bf16.gmra.mrb[0].mxu0 %v141
    %v181 = vpop.f32.mrb[0].mxu0
    %v182 = vadd.f32 0.0, %v181
    %v183 = vpop.f32.mrb[0].mxu0
    %v184 = vpop.f32.mrb[0].mxu0
    %v185 = vadd.f32 0.0, %v184
    %v186 = vpop.f32.mrb[0].mxu0
    %187 = vdwg.mxu0
    %v188 = vpack.c.bf16 %v185, %v182
    %v190 = vsel %vm139, %v130, 0
    %192 = vmatprep.subr.bf16.mxu0 0
    %193 = vmatpush1.bf16.msra.mxu0 %v145
    %194 = vmatprep.subr.bf16.mxu0 0
    %195 = vmatpush1.bf16.msra.mxu0 0
    %196 = vmatprep.subr.bf16.mxu0 0
    %197 = vmatpush1.bf16.msra.mxu0 0
    %198 = vmatprep.subr.bf16.mxu0 0
    %199 = vmatpush1.bf16.msra.mxu0 0
    %200 = vmatprep.subr.bf16.mxu0 0
    %201 = vmatpush1.bf16.msra.mxu0 0
    %202 = vmatprep.subr.bf16.mxu0 0
    %203 = vmatpush1.bf16.msra.mxu0 0
    %204 = vmatprep.subr.bf16.mxu0 0
    %205 = vmatpush1.bf16.msra.mxu0 0
    %206 = vmatprep.subr.bf16.mxu0 0
    %207 = vmatpush1.bf16.msra.mxu0 0
    %208 = vmatprep.subr.bf16.mxu0 0
    %209 = vmatpush1.bf16.msra.mxu0 0
    %210 = vmatprep.subr.bf16.mxu0 0
    %211 = vmatpush1.bf16.msra.mxu0 0
    %212 = vmatprep.subr.bf16.mxu0 0
    %213 = vmatpush1.bf16.msra.mxu0 0
    %214 = vmatprep.subr.bf16.mxu0 0
    %215 = vmatpush1.bf16.msra.mxu0 0
    %216 = vmatprep.subr.bf16.mxu0 0
    %217 = vmatpush1.bf16.msra.mxu0 0
    %218 = vmatprep.subr.bf16.mxu0 0
    %219 = vmatpush1.bf16.msra.mxu0 0
    %220 = vmatprep.subr.bf16.mxu0 0
    %221 = vmatpush1.bf16.msra.mxu0 0
    %222 = vmatprep.subr.bf16.mxu0 0
    %223 = vmatpush1.bf16.msra.mxu0 0
    %224 = vmatprep.mubr.bf16.mxu0 0
    %225 = vmatmul.mubr.bf16.gmra.mrb[0].mxu0 %v190
    %v226 = vpop.f32.mrb[0].mxu0
    %v227 = vadd.f32 0.0, %v226
    %v228 = vpop.f32.mrb[0].mxu0
    %v229 = vpop.f32.mrb[0].mxu0
    %v230 = vadd.f32 0.0, %v229
    %v231 = vpop.f32.mrb[0].mxu0
    %232 = vdwg.mxu0
    %v233 = vpack.c.bf16 %v230, %v227
    %vm234 = vcmask 15360
    %v236 = vsel %vm234, %v138, 0
    %vm238 = vcmask 1040384
    %v240 = vsel %vm238, %v83, 0
    %242 = vmatprep.subr.bf16.mxu0 0
    %243 = vmatpush1.bf16.msra.mxu0 %v240
    %244 = vmatprep.subr.bf16.mxu0 0
    %245 = vmatpush1.bf16.msra.mxu0 0
    %246 = vmatprep.subr.bf16.mxu0 0
    %247 = vmatpush1.bf16.msra.mxu0 0
    %248 = vmatprep.subr.bf16.mxu0 0
    %249 = vmatpush1.bf16.msra.mxu0 0
    %250 = vmatprep.subr.bf16.mxu0 0
    %251 = vmatpush1.bf16.msra.mxu0 0
    %252 = vmatprep.subr.bf16.mxu0 0
    %253 = vmatpush1.bf16.msra.mxu0 0
    %254 = vmatprep.subr.bf16.mxu0 0
    %255 = vmatpush1.bf16.msra.mxu0 0
    %256 = vmatprep.subr.bf16.mxu0 0
    %257 = vmatpush1.bf16.msra.mxu0 0
    %258 = vmatprep.subr.bf16.mxu0 0
    %259 = vmatpush1.bf16.msra.mxu0 0
    %260 = vmatprep.subr.bf16.mxu0 0
    %261 = vmatpush1.bf16.msra.mxu0 0
    %262 = vmatprep.subr.bf16.mxu0 0
    %263 = vmatpush1.bf16.msra.mxu0 0
    %264 = vmatprep.subr.bf16.mxu0 0
    %265 = vmatpush1.bf16.msra.mxu0 0
    %266 = vmatprep.subr.bf16.mxu0 0
    %267 = vmatpush1.bf16.msra.mxu0 0
    %268 = vmatprep.subr.bf16.mxu0 0
    %269 = vmatpush1.bf16.msra.mxu0 0
    %270 = vmatprep.subr.bf16.mxu0 0
    %271 = vmatpush1.bf16.msra.mxu0 0
    %272 = vmatprep.subr.bf16.mxu0 0
    %273 = vmatpush1.bf16.msra.mxu0 0
    %274 = vmatprep.mubr.bf16.mxu0 0
    %275 = vmatmul.mubr.bf16.gmra.mrb[0].mxu0 %v236
    %v276 = vpop.f32.mrb[0].mxu0
    %v277 = vadd.f32 0.0, %v276
    %v278 = vpop.f32.mrb[0].mxu0
    %v279 = vpop.f32.mrb[0].mxu0
    %v280 = vadd.f32 0.0, %v279
    %v281 = vpop.f32.mrb[0].mxu0
    %282 = vdwg.mxu0
    %v283 = vpack.c.bf16 %v280, %v277
    %v285 = vsel %vm234, %v133, 0
    %287 = vmatprep.subr.bf16.mxu0 0
    %288 = vmatpush1.bf16.msra.mxu0 %v240
    %289 = vmatprep.subr.bf16.mxu0 0
    %290 = vmatpush1.bf16.msra.mxu0 0
    %291 = vmatprep.subr.bf16.mxu0 0
    %292 = vmatpush1.bf16.msra.mxu0 0
    %293 = vmatprep.subr.bf16.mxu0 0
    %294 = vmatpush1.bf16.msra.mxu0 0
    %295 = vmatprep.subr.bf16.mxu0 0
    %296 = vmatpush1.bf16.msra.mxu0 0
    %297 = vmatprep.subr.bf16.mxu0 0
    %298 = vmatpush1.bf16.msra.mxu0 0
    %299 = vmatprep.subr.bf16.mxu0 0
    %300 = vmatpush1.bf16.msra.mxu0 0
    %301 = vmatprep.subr.bf16.mxu0 0
    %302 = vmatpush1.bf16.msra.mxu0 0
    %303 = vmatprep.subr.bf16.mxu0 0
    %304 = vmatpush1.bf16.msra.mxu0 0
    %305 = vmatprep.subr.bf16.mxu0 0
    %306 = vmatpush1.bf16.msra.mxu0 0
    %307 = vmatprep.subr.bf16.mxu0 0
    %308 = vmatpush1.bf16.msra.mxu0 0
    %309 = vmatprep.subr.bf16.mxu0 0
    %310 = vmatpush1.bf16.msra.mxu0 0
    %311 = vmatprep.subr.bf16.mxu0 0
    %312 = vmatpush1.bf16.msra.mxu0 0
    %313 = vmatprep.subr.bf16.mxu0 0
    %314 = vmatpush1.bf16.msra.mxu0 0
    %315 = vmatprep.subr.bf16.mxu0 0
    %316 = vmatpush1.bf16.msra.mxu0 0
    %317 = vmatprep.subr.bf16.mxu0 0
    %318 = vmatpush1.bf16.msra.mxu0 0
    %319 = vmatprep.mubr.bf16.mxu0 0
    %320 = vmatmul.mubr.bf16.gmra.mrb[0].mxu0 %v285
    %v321 = vpop.f32.mrb[0].mxu0
    %v322 = vadd.f32 0.0, %v321
    %v323 = vpop.f32.mrb[0].mxu0
    %v324 = vpop.f32.mrb[0].mxu0
    %v325 = vpop.f32.mrb[0].mxu0
    %326 = vdwg.mxu0
    %v327 = vpack.c.bf16 %v322, %v322
    %329 = vrot.lane.b32.xlu0 %v188, 64
    %v330 = vpop.permute.xlu0 %329
    %332 = vrot.lane.b32.xlu0 %v283, 64
    %v333 = vpop.permute.xlu0 %332
    %vm334 = vcmask 523264
    %v337 = vsel %vm334, %v81, %v330
    %v341 = vsel %vm334, %v233, %v333
    %v343 = vld [vmem:[%s7] sm:$0xf]
    %v344 = vld [vmem:[%s7 + $0x4] sm:$0xf]
    %v345 = vld [vmem:[%s7 + $0x8] sm:$0xf]
    %v346 = vld [vmem:[%s7 + $0xc] sm:$0xf]
    %v347 = vld [vmem:[%s7 + $0x10] sm:$0xf]
    %v348 = vld [vmem:[%s7 + $0x14] sm:$0xf]
    %v349 = vld [vmem:[%s7 + $0x18] sm:$0xf]
    %v350 = vld [vmem:[%s7 + $0x1c] sm:$0xf]
    %v351 = vld [vmem:[%s7 + $0x20] sm:$0xf]
    %v352 = vld [vmem:[%s7 + $0x24] sm:$0xf]
    %v353 = vld [vmem:[%s7 + $0x28] sm:$0xf]
    %v354 = vld [vmem:[%s7 + $0x2c] sm:$0xf]
    %v355 = vld [vmem:[%s7 + $0x30] sm:$0xf]
    %v356 = vld [vmem:[%s7 + $0x34] sm:$0xf]
    %v357 = vld [vmem:[%s7 + $0x38] sm:$0xf]
    %v358 = vld [vmem:[%s7 + $0x3c] sm:$0xf]
    %v359 = vld [vmem:[%s7 + $0x40] sm:$0xf]
    %v360 = vld [vmem:[%s7 + $0x44] sm:$0xf]
    %v361 = vld [vmem:[%s7 + $0x48] sm:$0xf]
    %v362 = vld [vmem:[%s7 + $0x4c] sm:$0xf]
    %v363 = vld [vmem:[%s7 + $0x50] sm:$0xf]
    %v364 = vld [vmem:[%s7 + $0x54] sm:$0xf]
    %v365 = vld [vmem:[%s7 + $0x58] sm:$0xf]
    %v366 = vld [vmem:[%s7 + $0x5c] sm:$0xf]
    %v367 = vld [vmem:[%s7 + $0x60] sm:$0xf]
    %v368 = vld [vmem:[%s7 + $0x64] sm:$0xf]
    %v369 = vld [vmem:[%s7 + $0x68] sm:$0xf]
    %v370 = vld [vmem:[%s7 + $0x6c] sm:$0xf]
    %v371 = vld [vmem:[%s7 + $0x70] sm:$0xf]
    %v372 = vld [vmem:[%s7 + $0x74] sm:$0xf]
    %v373 = vld [vmem:[%s7 + $0x78] sm:$0xf]
    %v374 = vld [vmem:[%s7 + $0x7c] sm:$0xf]
    %v375 = vld [vmem:[%s8] sm:$0x1]
    %v377 = vlaneseq
    %v378 = vshrl.u32 %v377, 7
    %v379 = vsub.s32 0, %v378
    %v380 = vrot.slane %v375, %v379
    %v414 = vunpack.c.l.b16 %v343
    %v415 = vunpack.c.l.b16 %v344
    %v416 = vunpack.c.l.b16 %v345
    %v417 = vunpack.c.l.b16 %v346
    %v418 = vunpack.c.l.b16 %v347
    %v419 = vunpack.c.l.b16 %v348
    %v420 = vunpack.c.l.b16 %v349
    %v421 = vunpack.c.l.b16 %v350
    %v422 = vunpack.c.l.b16 %v351
    %v423 = vunpack.c.l.b16 %v352
    %v424 = vunpack.c.l.b16 %v353
    %v425 = vunpack.c.l.b16 %v354
    %v426 = vunpack.c.l.b16 %v355
    %v427 = vunpack.c.l.b16 %v356
    %v428 = vunpack.c.l.b16 %v357
    %v429 = vunpack.c.l.b16 %v358
    %v430 = vunpack.c.l.b16 %v359
    %v431 = vunpack.c.l.b16 %v360
    %v432 = vunpack.c.l.b16 %v361
    %v433 = vunpack.c.l.b16 %v362
    %v434 = vunpack.c.l.b16 %v363
    %v435 = vunpack.c.l.b16 %v364
    %v436 = vunpack.c.l.b16 %v365
    %v437 = vunpack.c.l.b16 %v366
    %v438 = vunpack.c.l.b16 %v367
    %v439 = vunpack.c.l.b16 %v368
    %v440 = vunpack.c.l.b16 %v369
    %v441 = vunpack.c.l.b16 %v370
    %v442 = vunpack.c.l.b16 %v371
    %v443 = vunpack.c.l.b16 %v372
    %v444 = vunpack.c.l.b16 %v373
    %v445 = vunpack.c.l.b16 %v374
    %v446 = vpack.c.b16 %v415, %v414
    %v447 = vpack.c.b16 %v417, %v416
    %v448 = vpack.c.b16 %v419, %v418
    %v449 = vpack.c.b16 %v421, %v420
    %v450 = vpack.c.b16 %v423, %v422
    %v451 = vpack.c.b16 %v425, %v424
    %v452 = vpack.c.b16 %v427, %v426
    %v453 = vpack.c.b16 %v429, %v428
    %v454 = vpack.c.b16 %v431, %v430
    %v455 = vpack.c.b16 %v433, %v432
    %v456 = vpack.c.b16 %v435, %v434
    %v457 = vpack.c.b16 %v437, %v436
    %v458 = vpack.c.b16 %v439, %v438
    %v459 = vpack.c.b16 %v441, %v440
    %v460 = vpack.c.b16 %v443, %v442
    %v461 = vpack.c.b16 %v445, %v444
    %478 = vmatprep.subr.bf16.mxu0 0
    %479 = vmatpush1.bf16.msra.mxu0 %v446
    %480 = vmatprep.subr.bf16.mxu0 0
    %481 = vmatpush1.bf16.msra.mxu0 %v447
    %482 = vmatprep.subr.bf16.mxu0 0
    %483 = vmatpush1.bf16.msra.mxu0 %v448
    %484 = vmatprep.subr.bf16.mxu0 0
    %485 = vmatpush1.bf16.msra.mxu0 %v449
    %486 = vmatprep.subr.bf16.mxu0 0
    %487 = vmatpush1.bf16.msra.mxu0 %v450
    %488 = vmatprep.subr.bf16.mxu0 0
    %489 = vmatpush1.bf16.msra.mxu0 %v451
    %490 = vmatprep.subr.bf16.mxu0 0
    %491 = vmatpush1.bf16.msra.mxu0 %v452
    %492 = vmatprep.subr.bf16.mxu0 0
    %493 = vmatpush1.bf16.msra.mxu0 %v453
    %494 = vmatprep.subr.bf16.mxu0 0
    %495 = vmatpush1.bf16.msra.mxu0 %v454
    %496 = vmatprep.subr.bf16.mxu0 0
    %497 = vmatpush1.bf16.msra.mxu0 %v455
    %498 = vmatprep.subr.bf16.mxu0 0
    %499 = vmatpush1.bf16.msra.mxu0 %v456
    %500 = vmatprep.subr.bf16.mxu0 0
    %501 = vmatpush1.bf16.msra.mxu0 %v457
    %502 = vmatprep.subr.bf16.mxu0 0
    %503 = vmatpush1.bf16.msra.mxu0 %v458
    %504 = vmatprep.subr.bf16.mxu0 0
    %505 = vmatpush1.bf16.msra.mxu0 %v459
    %506 = vmatprep.subr.bf16.mxu0 0
    %507 = vmatpush1.bf16.msra.mxu0 %v460
    %508 = vmatprep.subr.bf16.mxu0 0
    %509 = vmatpush1.bf16.msra.mxu0 %v461
    %510 = vmatprep.mubr.bf16.mxu0 %v341
    %511 = vmatmul.mubr.bf16.gmra.mrb[0].mxu0 %v337
    %v512 = vpop.f32.mrb[0].mxu0
    %v513 = vadd.f32 %v380, %v512
    %v514 = vpop.f32.mrb[0].mxu0
    %v515 = vpop.f32.mrb[0].mxu0
    %v516 = vadd.f32 %v380, %v515
    %v517 = vpop.f32.mrb[0].mxu0
    %518 = vdwg.mxu0
    %519 = vst.msk [vmem:[#allocation4] sm:$0xff] %vm334, %v513
    %520 = vst.msk [vmem:[#allocation4 + $0x8] sm:$0xff] %vm334, %v516
    %v521 = vpack.c.bf16 %v516, %v513
    %523 = vrot.lane.b32.xlu0 %v233, 64
    %v524 = vpop.permute.xlu0 %523
    %v527 = vsel %vm334, %v188, %v524
    %v529 = vsel %vm334, %v233, %v330
    %v531 = vld [vmem:[%s9] sm:$0xf]
    %v532 = vld [vmem:[%s9 + $0x4] sm:$0xf]
    %v533 = vld [vmem:[%s9 + $0x8] sm:$0xf]
    %v534 = vld [vmem:[%s9 + $0xc] sm:$0xf]
    %v535 = vld [vmem:[%s9 + $0x10] sm:$0xf]
    %v536 = vld [vmem:[%s9 + $0x14] sm:$0xf]
    %v537 = vld [vmem:[%s9 + $0x18] sm:$0xf]
    %v538 = vld [vmem:[%s9 + $0x1c] sm:$0xf]
    %v539 = vld [vmem:[%s9 + $0x20] sm:$0xf]
    %v540 = vld [vmem:[%s9 + $0x24] sm:$0xf]
    %v541 = vld [vmem:[%s9 + $0x28] sm:$0xf]
    %v542 = vld [vmem:[%s9 + $0x2c] sm:$0xf]
    %v543 = vld [vmem:[%s9 + $0x30] sm:$0xf]
    %v544 = vld [vmem:[%s9 + $0x34] sm:$0xf]
    %v545 = vld [vmem:[%s9 + $0x38] sm:$0xf]
    %v546 = vld [vmem:[%s9 + $0x3c] sm:$0xf]
    %v547 = vld [vmem:[%s9 + $0x40] sm:$0xf]
    %v548 = vld [vmem:[%s9 + $0x44] sm:$0xf]
    %v549 = vld [vmem:[%s9 + $0x48] sm:$0xf]
    %v550 = vld [vmem:[%s9 + $0x4c] sm:$0xf]
    %v551 = vld [vmem:[%s9 + $0x50] sm:$0xf]
    %v552 = vld [vmem:[%s9 + $0x54] sm:$0xf]
    %v553 = vld [vmem:[%s9 + $0x58] sm:$0xf]
    %v554 = vld [vmem:[%s9 + $0x5c] sm:$0xf]
    %v555 = vld [vmem:[%s10] sm:$0x1]
    %v557 = vlaneseq
    %v558 = vshrl.u32 %v557, 7
    %v559 = vsub.s32 0, %v558
    %v560 = vrot.slane %v555, %v559
    %v586 = vunpack.c.l.b16 %v531
    %v587 = vunpack.c.l.b16 %v532
    %v588 = vunpack.c.l.b16 %v533
    %v589 = vunpack.c.l.b16 %v534
    %v590 = vunpack.c.l.b16 %v535
    %v591 = vunpack.c.l.b16 %v536
    %v592 = vunpack.c.l.b16 %v537
    %v593 = vunpack.c.l.b16 %v538
    %v594 = vunpack.c.l.b16 %v539
    %v595 = vunpack.c.l.b16 %v540
    %v596 = vunpack.c.l.b16 %v541
    %v597 = vunpack.c.l.b16 %v542
    %v598 = vunpack.c.l.b16 %v543
    %v599 = vunpack.c.l.b16 %v544
    %v600 = vunpack.c.l.b16 %v545
    %v601 = vunpack.c.l.b16 %v546
    %v602 = vunpack.c.l.b16 %v547
    %v603 = vunpack.c.l.b16 %v548
    %v604 = vunpack.c.l.b16 %v549
    %v605 = vunpack.c.l.b16 %v550
    %v606 = vunpack.c.l.b16 %v551
    %v607 = vunpack.c.l.b16 %v552
    %v608 = vunpack.c.l.b16 %v553
    %v609 = vunpack.c.l.b16 %v554
    %v610 = vpack.c.b16 %v587, %v586
    %v611 = vpack.c.b16 %v589, %v588
    %v612 = vpack.c.b16 %v591, %v590
    %v613 = vpack.c.b16 %v593, %v592
    %v614 = vpack.c.b16 %v595, %v594
    %v615 = vpack.c.b16 %v597, %v596
    %v616 = vpack.c.b16 %v599, %v598
    %v617 = vpack.c.b16 %v601, %v600
    %v618 = vpack.c.b16 %v603, %v602
    %v619 = vpack.c.b16 %v605, %v604
    %v620 = vpack.c.b16 %v607, %v606
    %v621 = vpack.c.b16 %v609, %v608
    %v635 = vsel %vm334, %v521, 0
    %637 = vmatprep.subr.bf16.mxu0 0
    %638 = vmatpush1.bf16.msra.mxu0 %v610
    %639 = vmatprep.subr.bf16.mxu0 0
    %640 = vmatpush1.bf16.msra.mxu0 %v611
    %641 = vmatprep.subr.bf16.mxu0 0
    %642 = vmatpush1.bf16.msra.mxu0 %v612
    %643 = vmatprep.subr.bf16.mxu0 0
    %644 = vmatpush1.bf16.msra.mxu0 %v613
    %645 = vmatprep.subr.bf16.mxu0 0
    %646 = vmatpush1.bf16.msra.mxu0 %v614
    %647 = vmatprep.subr.bf16.mxu0 0
    %648 = vmatpush1.bf16.msra.mxu0 %v615
    %649 = vmatprep.subr.bf16.mxu0 0
    %650 = vmatpush1.bf16.msra.mxu0 %v616
    %651 = vmatprep.subr.bf16.mxu0 0
    %652 = vmatpush1.bf16.msra.mxu0 %v617
    %653 = vmatprep.subr.bf16.mxu0 0
    %654 = vmatpush1.bf16.msra.mxu0 %v618
    %655 = vmatprep.subr.bf16.mxu0 0
    %656 = vmatpush1.bf16.msra.mxu0 %v619
    %657 = vmatprep.subr.bf16.mxu0 0
    %658 = vmatpush1.bf16.msra.mxu0 %v620
    %659 = vmatprep.subr.bf16.mxu0 0
    %660 = vmatpush1.bf16.msra.mxu0 %v621
    %661 = vmatprep.subr.bf16.mxu0 0
    %662 = vmatpush1.bf16.msra.mxu0 0
    %663 = vmatprep.subr.bf16.mxu0 0
    %664 = vmatpush1.bf16.msra.mxu0 0
    %665 = vmatprep.subr.bf16.mxu0 0
    %666 = vmatpush1.bf16.msra.mxu0 0
    %667 = vmatprep.subr.bf16.mxu0 0
    %668 = vmatpush1.bf16.msra.mxu0 0
    %669 = vmatprep.mubr.bf16.mxu0 %v635
    %670 = vmatmul.mubr.bf16.gmra.mrb[0].mxu0 %v527
    %v671 = vpop.f32.mrb[0].mxu0
    %v672 = vadd.f32 %v560, %v671
    %v673 = vpop.f32.mrb[0].mxu0
    %v674 = vpop.f32.mrb[0].mxu0
    %v675 = vadd.f32 %v560, %v674
    %v676 = vpop.f32.mrb[0].mxu0
    %677 = vmatprep.mubr.bf16.mxu0 %v635
    %678 = vmatmul.mubr.bf16.gmra.mrb[0].mxu0 %v529
    %v679 = vpop.f32.mrb[0].mxu0
    %v680 = vadd.f32 %v560, %v679
    %v681 = vpop.f32.mrb[0].mxu0
    %v682 = vpop.f32.mrb[0].mxu0
    %v683 = vadd.f32 %v560, %v682
    %v684 = vpop.f32.mrb[0].mxu0
    %685 = vdwg.mxu0
    %v686 = vmul.f32 %v672, 0.01
    %v687 = vmul.f32 %v675, 0.01
    %v688 = vmul.f32 %v680, 0.01
    %v689 = vmul.f32 %v683, 0.01
    %v690 = vmax.f32 %v672, %v686
    %v691 = vmax.f32 %v675, %v687
    %v692 = vmax.f32 %v680, %v688
    %v693 = vmax.f32 %v683, %v689
    %v694 = vld [vmem:[%s11] sm:$0x1]
    %v696 = vlaneseq
    %v697 = vshrl.u32 %v696, 7
    %v698 = vsub.s32 0, %v697
    %v699 = vrot.slane %v694, %v698
    %v701 = vmul.f32 %v690, %v699
    %v702 = vmul.f32 %v691, %v699
    %v703 = vmul.f32 %v692, %v699
    %v704 = vmul.f32 %v693, %v699
    %v705 = vsel %vm334, %v701, 0.0
    %706 = vadd.xlane.f32.xlu0 %v705
    %v707 = vpop.xlane.xlu0 %706
    %v708 = vsel %vm334, %v702, 0.0
    %709 = vadd.xlane.f32.xlu0 %v708
    %v710 = vpop.xlane.xlu0 %709
    %v711 = vsel %vm334, %v703, 0.0
    %712 = vadd.xlane.f32.xlu0 %v711
    %v713 = vpop.xlane.xlu0 %712
    %v714 = vsel %vm334, %v704, 0.0
    %715 = vadd.xlane.f32.xlu0 %v714
    %v716 = vpop.xlane.xlu0 %715
    %v717 = vsel %vm94, %v707, -1e+30
    %v718 = vsel %vm95, %v710, -1e+30
    %v719 = vsel %vm139, %v717, -inf
    %v720 = vsel %vm139, %v718, -inf
    %v721 = vmax.f32 %v719, %v720
    %v722 = vrot.slane %v721, 4
    %v723 = vmax.f32 %v721, %v722
    %v724 = vrot.slane %v723, 2
    %v725 = vmax.f32 %v723, %v724
    %v726 = vrot.slane %v725, 1
    %v727 = vmax.f32 %v725, %v726
    %v728 = vsel %vm94, %v727, -1e+30
    %v729 = vsel %vm95, %v727, -1e+30
    %v730 = vsel %vm139, %v728, -inf
    %731 = vmax.xlane.f32.xlu0 %v730
    %v732 = vpop.xlane.xlu0 %731
    %v733 = vsel %vm139, %v729, -inf
    %734 = vmax.xlane.f32.xlu0 %v733
    %v735 = vpop.xlane.xlu0 %734
    %v736 = vsub.f32 %v707, %v732
    %v737 = vsub.f32 %v710, %v735
    %v738 = vmul.f32 %v736, 1.442695
    %v739 = vpow.pop %v738
    %v740 = vmul.f32 %v737, 1.442695
    %v741 = vpow.pop %v740
    %v742 = vsel %vm94, %v739, 0.0
    %v743 = vsel %vm95, %v741, 0.0
    %v744 = vsel %vm139, %v742, 0.0
    %v745 = vsel %vm139, %v743, 0.0
    %v746 = vadd.f32 %v744, %v745
    %v747 = vrot.slane %v746, 4
    %v748 = vadd.f32 %v746, %v747
    %v749 = vrot.slane %v748, 2
    %v750 = vadd.f32 %v748, %v749
    %v751 = vrot.slane %v750, 1
    %v752 = vadd.f32 %v750, %v751
    %v753 = vsel %vm94, %v752, 0.0
    %v754 = vsel %vm95, %v752, 0.0
    %v755 = vsel %vm139, %v753, 0.0
    %756 = vadd.xlane.f32.xlu0 %v755
    %v757 = vpop.xlane.xlu0 %756
    %v758 = vsel %vm139, %v754, 0.0
    %759 = vadd.xlane.f32.xlu0 %v758
    %v760 = vpop.xlane.xlu0 %759
    %v761 = vadd.f32 %v757, 1e-16
    %v762 = vadd.f32 %v760, 1e-16
    %v763 = vrcp.pop %v761
    %v764 = vmul.f32 %v739, %v763
    %v765 = vrcp.pop %v762
    %v766 = vmul.f32 %v741, %v765
    %v767 = vsel %vm104, %v713, -1e+30
    %v768 = vsel %vm105, %v716, -1e+30
    %v769 = vsel %vm139, %v767, -inf
    %v770 = vsel %vm139, %v768, -inf
    %v771 = vmax.f32 %v769, %v770
    %v772 = vrot.slane %v771, 4
    %v773 = vmax.f32 %v771, %v772
    %v774 = vrot.slane %v773, 2
    %v775 = vmax.f32 %v773, %v774
    %v776 = vrot.slane %v775, 1
    %v777 = vmax.f32 %v775, %v776
    %v778 = vsel %vm104, %v777, -1e+30
    %v779 = vsel %vm105, %v777, -1e+30
    %v780 = vsel %vm139, %v778, -inf
    %781 = vmax.xlane.f32.xlu0 %v780
    %v782 = vpop.xlane.xlu0 %781
    %v783 = vsel %vm139, %v779, -inf
    %784 = vmax.xlane.f32.xlu0 %v783
    %v785 = vpop.xlane.xlu0 %784
    %v786 = vsub.f32 %v713, %v782
    %v787 = vsub.f32 %v716, %v785
    %v788 = vmul.f32 %v786, 1.442695
    %v789 = vpow.pop %v788
    %v790 = vmul.f32 %v787, 1.442695
    %v791 = vpow.pop %v790
    %v792 = vsel %vm104, %v789, 0.0
    %v793 = vsel %vm105, %v791, 0.0
    %v794 = vsel %vm139, %v792, 0.0
    %v795 = vsel %vm139, %v793, 0.0
    %v796 = vadd.f32 %v794, %v795
    %v797 = vrot.slane %v796, 4
    %v798 = vadd.f32 %v796, %v797
    %v799 = vrot.slane %v798, 2
    %v800 = vadd.f32 %v798, %v799
    %v801 = vrot.slane %v800, 1
    %v802 = vadd.f32 %v800, %v801
    %v803 = vsel %vm104, %v802, 0.0
    %v804 = vsel %vm105, %v802, 0.0
    %v805 = vsel %vm139, %v803, 0.0
    %806 = vadd.xlane.f32.xlu0 %v805
    %v807 = vpop.xlane.xlu0 %806
    %v808 = vsel %vm139, %v804, 0.0
    %809 = vadd.xlane.f32.xlu0 %v808
    %v810 = vpop.xlane.xlu0 %809
    %v811 = vadd.f32 %v807, 1e-16
    %v812 = vadd.f32 %v810, 1e-16
    %v813 = vrcp.pop %v811
    %v814 = vmul.f32 %v789, %v813
    %v815 = vrcp.pop %v812
    %v816 = vmul.f32 %v791, %v815
    %v817 = vmul.f32 %v764, %v672
    %v818 = vmul.f32 %v766, %v675
    %v819 = vpack.c.bf16 %v818, %v817
    %v820 = vmul.f32 %v814, %v680
    %v821 = vmul.f32 %v816, %v683
    %v822 = vpack.c.bf16 %v821, %v820
    %824 = vrot.lane.b32.xlu0 %v819, 64
    %v825 = vpop.permute.xlu0 %824
    %v828 = vsel %vm334, %v825, 0
    %v831 = vsel %vm334, 0, %v822
    %833 = vxpose.xlu0.c.b16.start [1/8] %v125, 128
    %834 = vxpose.xlu0.c.b16.cont [2/8] %v130, 128
    %835 = vxpose.xlu0.c.b16.cont [3/8] 0, 128
    %836 = vxpose.xlu0.c.b16.cont [4/8] 0, 128
    %837 = vxpose.xlu0.c.b16.cont [5/8] 0, 128
    %838 = vxpose.xlu0.c.b16.cont [6/8] 0, 128
    %839 = vxpose.xlu0.c.b16.cont [7/8] 0, 128
    %840 = vxpose.xlu0.c.b16.end [8/8] 0, 128
    %v841 = vpop.trf.xlu0
    %v842 = vpop.trf.xlu0
    %v843 = vpop.trf.xlu0
    %v844 = vpop.trf.xlu0
    %v845 = vpop.trf.xlu0
    %v846 = vpop.trf.xlu0
    %v847 = vpop.trf.xlu0
    %v848 = vpop.trf.xlu0
    %vm849 = vcmask 261120
    %v851 = vsel %vm849, %v841, 0
    %853 = vmatprep.subr.bf16.mxu0 0
    %854 = vmatpush1.bf16.msra.mxu0 %v828
    %855 = vmatprep.subr.bf16.mxu0 0
    %856 = vmatpush1.bf16.msra.mxu0 %v831
    %857 = vmatprep.subr.bf16.mxu0 0
    %858 = vmatpush1.bf16.msra.mxu0 0
    %859 = vmatprep.subr.bf16.mxu0 0
    %860 = vmatpush1.bf16.msra.mxu0 0
    %861 = vmatprep.subr.bf16.mxu0 0
    %862 = vmatpush1.bf16.msra.mxu0 0
    %863 = vmatprep.subr.bf16.mxu0 0
    %864 = vmatpush1.bf16.msra.mxu0 0
    %865 = vmatprep.subr.bf16.mxu0 0
    %866 = vmatpush1.bf16.msra.mxu0 0
    %867 = vmatprep.subr.bf16.mxu0 0
    %868 = vmatpush1.bf16.msra.mxu0 0
    %869 = vmatprep.subr.bf16.mxu0 0
    %870 = vmatpush1.bf16.msra.mxu0 0
    %871 = vmatprep.subr.bf16.mxu0 0
    %872 = vmatpush1.bf16.msra.mxu0 0
    %873 = vmatprep.subr.bf16.mxu0 0
    %874 = vmatpush1.bf16.msra.mxu0 0
    %875 = vmatprep.subr.bf16.mxu0 0
    %876 = vmatpush1.bf16.msra.mxu0 0
    %877 = vmatprep.subr.bf16.mxu0 0
    %878 = vmatpush1.bf16.msra.mxu0 0
    %879 = vmatprep.subr.bf16.mxu0 0
    %880 = vmatpush1.bf16.msra.mxu0 0
    %881 = vmatprep.subr.bf16.mxu0 0
    %882 = vmatpush1.bf16.msra.mxu0 0
    %883 = vmatprep.subr.bf16.mxu0 0
    %884 = vmatpush1.bf16.msra.mxu0 0
    %885 = vmatprep.mubr.bf16.mxu0 0
    %886 = vmatmul.mubr.bf16.gmra.mrb[0].mxu0 %v851
    %v887 = vpop.f32.mrb[0].mxu0
    %v888 = vadd.f32 0.0, %v887
    %v889 = vpop.f32.mrb[0].mxu0
    %v890 = vpop.f32.mrb[0].mxu0
    %v891 = vpop.f32.mrb[0].mxu0
    %892 = vdwg.mxu0
    %v893 = vpack.c.bf16 %v888, %v888
    %895 = vrot.lane.b32.xlu0 %v893, 64
    %v896 = vpop.permute.xlu0 %895
    %898 = vrot.lane.b32.xlu0 %v327, 64
    %v899 = vpop.permute.xlu0 %898
    %v901 = vsel %vm334, %v78, %v896
    %v904 = vsel %vm334, %v896, %v899
    %v906 = vld [vmem:[%s12] sm:$0xf]
    %v907 = vld [vmem:[%s12 + $0x4] sm:$0xf]
    %v908 = vld [vmem:[%s12 + $0x8] sm:$0xf]
    %v909 = vld [vmem:[%s12 + $0xc] sm:$0xf]
    %v910 = vld [vmem:[%s12 + $0x10] sm:$0xf]
    %v911 = vld [vmem:[%s12 + $0x14] sm:$0xf]
    %v912 = vld [vmem:[%s12 + $0x18] sm:$0xf]
    %v913 = vld [vmem:[%s12 + $0x1c] sm:$0xf]
    %v914 = vld [vmem:[%s12 + $0x20] sm:$0xf]
    %v915 = vld [vmem:[%s12 + $0x24] sm:$0xf]
    %v916 = vld [vmem:[%s12 + $0x28] sm:$0xf]
    %v917 = vld [vmem:[%s12 + $0x2c] sm:$0xf]
    %v918 = vld [vmem:[%s12 + $0x30] sm:$0xf]
    %v919 = vld [vmem:[%s12 + $0x34] sm:$0xf]
    %v920 = vld [vmem:[%s12 + $0x38] sm:$0xf]
    %v921 = vld [vmem:[%s12 + $0x3c] sm:$0xf]
    %v922 = vld [vmem:[%s12 + $0x40] sm:$0xf]
    %v923 = vld [vmem:[%s12 + $0x44] sm:$0xf]
    %v924 = vld [vmem:[%s12 + $0x48] sm:$0xf]
    %v925 = vld [vmem:[%s12 + $0x4c] sm:$0xf]
    %v926 = vld [vmem:[%s12 + $0x50] sm:$0xf]
    %v927 = vld [vmem:[%s12 + $0x54] sm:$0xf]
    %v928 = vld [vmem:[%s12 + $0x58] sm:$0xf]
    %v929 = vld [vmem:[%s12 + $0x5c] sm:$0xf]
    %v930 = vld [vmem:[%s12 + $0x60] sm:$0xf]
    %v931 = vld [vmem:[%s12 + $0x64] sm:$0xf]
    %v932 = vld [vmem:[%s12 + $0x68] sm:$0xf]
    %v933 = vld [vmem:[%s12 + $0x6c] sm:$0xf]
    %v934 = vld [vmem:[%s12 + $0x70] sm:$0xf]
    %v935 = vld [vmem:[%s12 + $0x74] sm:$0xf]
    %v936 = vld [vmem:[%s12 + $0x78] sm:$0xf]
    %v937 = vld [vmem:[%s12 + $0x7c] sm:$0xf]
    %v938 = vld [vmem:[%s13] sm:$0x1]
    %v940 = vlaneseq
    %v941 = vshrl.u32 %v940, 7
    %v942 = vsub.s32 0, %v941
    %v943 = vrot.slane %v938, %v942
    %v977 = vunpack.c.l.b16 %v906
    %v978 = vunpack.c.l.b16 %v907
    %v979 = vunpack.c.l.b16 %v908
    %v980 = vunpack.c.l.b16 %v909
    %v981 = vunpack.c.l.b16 %v910
    %v982 = vunpack.c.l.b16 %v911
    %v983 = vunpack.c.l.b16 %v912
    %v984 = vunpack.c.l.b16 %v913
    %v985 = vunpack.c.l.b16 %v914
    %v986 = vunpack.c.l.b16 %v915
    %v987 = vunpack.c.l.b16 %v916
    %v988 = vunpack.c.l.b16 %v917
    %v989 = vunpack.c.l.b16 %v918
    %v990 = vunpack.c.l.b16 %v919
    %v991 = vunpack.c.l.b16 %v920
    %v992 = vunpack.c.l.b16 %v921
    %v993 = vunpack.c.l.b16 %v922
    %v994 = vunpack.c.l.b16 %v923
    %v995 = vunpack.c.l.b16 %v924
    %v996 = vunpack.c.l.b16 %v925
    %v997 = vunpack.c.l.b16 %v926
    %v998 = vunpack.c.l.b16 %v927
    %v999 = vunpack.c.l.b16 %v928
    %v1000 = vunpack.c.l.b16 %v929
    %v1001 = vunpack.c.l.b16 %v930
    %v1002 = vunpack.c.l.b16 %v931
    %v1003 = vunpack.c.l.b16 %v932
    %v1004 = vunpack.c.l.b16 %v933
    %v1005 = vunpack.c.l.b16 %v934
    %v1006 = vunpack.c.l.b16 %v935
    %v1007 = vunpack.c.l.b16 %v936
    %v1008 = vunpack.c.l.b16 %v937
    %v1009 = vpack.c.b16 %v978, %v977
    %v1010 = vpack.c.b16 %v980, %v979
    %v1011 = vpack.c.b16 %v982, %v981
    %v1012 = vpack.c.b16 %v984, %v983
    %v1013 = vpack.c.b16 %v986, %v985
    %v1014 = vpack.c.b16 %v988, %v987
    %v1015 = vpack.c.b16 %v990, %v989
    %v1016 = vpack.c.b16 %v992, %v991
    %v1017 = vpack.c.b16 %v994, %v993
    %v1018 = vpack.c.b16 %v996, %v995
    %v1019 = vpack.c.b16 %v998, %v997
    %v1020 = vpack.c.b16 %v1000, %v999
    %v1021 = vpack.c.b16 %v1002, %v1001
    %v1022 = vpack.c.b16 %v1004, %v1003
    %v1023 = vpack.c.b16 %v1006, %v1005
    %v1024 = vpack.c.b16 %v1008, %v1007
    %1041 = vmatprep.subr.bf16.mxu0 0
    %1042 = vmatpush1.bf16.msra.mxu0 %v1009
    %1043 = vmatprep.subr.bf16.mxu0 0
    %1044 = vmatpush1.bf16.msra.mxu0 %v1010
    %1045 = vmatprep.subr.bf16.mxu0 0
    %1046 = vmatpush1.bf16.msra.mxu0 %v1011
    %1047 = vmatprep.subr.bf16.mxu0 0
    %1048 = vmatpush1.bf16.msra.mxu0 %v1012
    %1049 = vmatprep.subr.bf16.mxu0 0
    %1050 = vmatpush1.bf16.msra.mxu0 %v1013
    %1051 = vmatprep.subr.bf16.mxu0 0
    %1052 = vmatpush1.bf16.msra.mxu0 %v1014
    %1053 = vmatprep.subr.bf16.mxu0 0
    %1054 = vmatpush1.bf16.msra.mxu0 %v1015
    %1055 = vmatprep.subr.bf16.mxu0 0
    %1056 = vmatpush1.bf16.msra.mxu0 %v1016
    %1057 = vmatprep.subr.bf16.mxu0 0
    %1058 = vmatpush1.bf16.msra.mxu0 %v1017
    %1059 = vmatprep.subr.bf16.mxu0 0
    %1060 = vmatpush1.bf16.msra.mxu0 %v1018
    %1061 = vmatprep.subr.bf16.mxu0 0
    %1062 = vmatpush1.bf16.msra.mxu0 %v1019
    %1063 = vmatprep.subr.bf16.mxu0 0
    %1064 = vmatpush1.bf16.msra.mxu0 %v1020
    %1065 = vmatprep.subr.bf16.mxu0 0
    %1066 = vmatpush1.bf16.msra.mxu0 %v1021
    %1067 = vmatprep.subr.bf16.mxu0 0
    %1068 = vmatpush1.bf16.msra.mxu0 %v1022
    %1069 = vmatprep.subr.bf16.mxu0 0
    %1070 = vmatpush1.bf16.msra.mxu0 %v1023
    %1071 = vmatprep.subr.bf16.mxu0 0
    %1072 = vmatpush1.bf16.msra.mxu0 %v1024
    %1073 = vmatprep.mubr.bf16.mxu0 %v904
    %1074 = vmatmul.mubr.bf16.gmra.mrb[0].mxu0 %v901
    %v1075 = vpop.f32.mrb[0].mxu0
    %v1076 = vadd.f32 %v943, %v1075
    %v1077 = vpop.f32.mrb[0].mxu0
    %v1078 = vpop.f32.mrb[0].mxu0
    %v1079 = vpop.f32.mrb[0].mxu0
    %1080 = vdwg.mxu0
    %1081 = vst.msk [vmem:[#allocation2] sm:$0xff] %vm334, %v1076
    %v1082 = vpack.c.bf16 %v1076, %v1076
    %1084 = vrot.lane.b32.xlu0 %v1082, 64
    %v1085 = vpop.permute.xlu0 %1084
    %v1088 = vsel %vm334, %v327, %v1085
    %v1090 = vld [vmem:[%s14] sm:$0xf]
    %v1091 = vld [vmem:[%s14 + $0x4] sm:$0xf]
    %v1092 = vld [vmem:[%s14 + $0x8] sm:$0xf]
    %v1093 = vld [vmem:[%s14 + $0xc] sm:$0xf]
    %v1094 = vld [vmem:[%s14 + $0x10] sm:$0xf]
    %v1095 = vld [vmem:[%s14 + $0x14] sm:$0xf]
    %v1096 = vld [vmem:[%s14 + $0x18] sm:$0xf]
    %v1097 = vld [vmem:[%s14 + $0x1c] sm:$0xf]
    %v1098 = vld [vmem:[%s14 + $0x20] sm:$0xf]
    %v1099 = vld [vmem:[%s14 + $0x24] sm:$0xf]
    %v1100 = vld [vmem:[%s14 + $0x28] sm:$0xf]
    %v1101 = vld [vmem:[%s14 + $0x2c] sm:$0xf]
    %v1102 = vld [vmem:[%s14 + $0x30] sm:$0xf]
    %v1103 = vld [vmem:[%s14 + $0x34] sm:$0xf]
    %v1104 = vld [vmem:[%s14 + $0x38] sm:$0xf]
    %v1105 = vld [vmem:[%s14 + $0x3c] sm:$0xf]
    %v1106 = vld [vmem:[%s15] sm:$0x1]
    %v1108 = vlaneseq
    %v1109 = vshrl.u32 %v1108, 7
    %v1110 = vsub.s32 0, %v1109
    %v1111 = vrot.slane %v1106, %v1110
    %v1129 = vunpack.c.l.b16 %v1090
    %v1130 = vunpack.c.l.b16 %v1091
    %v1131 = vunpack.c.l.b16 %v1092
    %v1132 = vunpack.c.l.b16 %v1093
    %v1133 = vunpack.c.l.b16 %v1094
    %v1134 = vunpack.c.l.b16 %v1095
    %v1135 = vunpack.c.l.b16 %v1096
    %v1136 = vunpack.c.l.b16 %v1097
    %v1137 = vunpack.c.l.b16 %v1098
    %v1138 = vunpack.c.l.b16 %v1099
    %v1139 = vunpack.c.l.b16 %v1100
    %v1140 = vunpack.c.l.b16 %v1101
    %v1141 = vunpack.c.l.b16 %v1102
    %v1142 = vunpack.c.l.b16 %v1103
    %v1143 = vunpack.c.l.b16 %v1104
    %v1144 = vunpack.c.l.b16 %v1105
    %v1145 = vpack.c.b16 %v1130, %v1129
    %v1146 = vpack.c.b16 %v1132, %v1131
    %v1147 = vpack.c.b16 %v1134, %v1133
    %v1148 = vpack.c.b16 %v1136, %v1135
    %v1149 = vpack.c.b16 %v1138, %v1137
    %v1150 = vpack.c.b16 %v1140, %v1139
    %v1151 = vpack.c.b16 %v1142, %v1141
    %v1152 = vpack.c.b16 %v1144, %v1143
    %1161 = vmatprep.subr.bf16.mxu0 0
    %1162 = vmatpush1.bf16.msra.mxu0 %v1145
    %1163 = vmatprep.subr.bf16.mxu0 0
    %1164 = vmatpush1.bf16.msra.mxu0 %v1146
    %1165 = vmatprep.subr.bf16.mxu0 0
    %1166 = vmatpush1.bf16.msra.mxu0 %v1147
    %1167 = vmatprep.subr.bf16.mxu0 0
    %1168 = vmatpush1.bf16.msra.mxu0 %v1148
    %1169 = vmatprep.subr.bf16.mxu0 0
    %1170 = vmatpush1.bf16.msra.mxu0 %v1149
    %1171 = vmatprep.subr.bf16.mxu0 0
    %1172 = vmatpush1.bf16.msra.mxu0 %v1150
    %1173 = vmatprep.subr.bf16.mxu0 0
    %1174 = vmatpush1.bf16.msra.mxu0 %v1151
    %1175 = vmatprep.subr.bf16.mxu0 0
    %1176 = vmatpush1.bf16.msra.mxu0 %v1152
    %1177 = vmatprep.subr.bf16.mxu0 0
    %1178 = vmatpush1.bf16.msra.mxu0 0
    %1179 = vmatprep.subr.bf16.mxu0 0
    %1180 = vmatpush1.bf16.msra.mxu0 0
    %1181 = vmatprep.subr.bf16.mxu0 0
    %1182 = vmatpush1.bf16.msra.mxu0 0
    %1183 = vmatprep.subr.bf16.mxu0 0
    %1184 = vmatpush1.bf16.msra.mxu0 0
    %1185 = vmatprep.subr.bf16.mxu0 0
    %1186 = vmatpush1.bf16.msra.mxu0 0
    %1187 = vmatprep.subr.bf16.mxu0 0
    %1188 = vmatpush1.bf16.msra.mxu0 0
    %1189 = vmatprep.subr.bf16.mxu0 0
    %1190 = vmatpush1.bf16.msra.mxu0 0
    %1191 = vmatprep.subr.bf16.mxu0 0
    %1192 = vmatpush1.bf16.msra.mxu0 0
    %1193 = vmatprep.mubr.bf16.mxu0 0
    %1194 = vmatmul.mubr.bf16.gmra.mrb[0].mxu0 %v1088
    %v1195 = vpop.f32.mrb[0].mxu0
    %v1196 = vadd.f32 %v1111, %v1195
    %v1197 = vpop.f32.mrb[0].mxu0
    %v1198 = vpop.f32.mrb[0].mxu0
    %v1199 = vpop.f32.mrb[0].mxu0
    %1200 = vdwg.mxu0
    %v1201 = vmul.f32 %v1196, 0.01
    %v1202 = vmax.f32 %v1196, %v1201
    %1204 = vrot.lane.b32.xlu0 %v521, 64
    %v1205 = vpop.permute.xlu0 %1204
    %v1208 = vsel %vm334, %v283, %v1205
    %v1210 = vld [vmem:[%s17] sm:$0xf]
    %v1211 = vld [vmem:[%s17 + $0x4] sm:$0xf]
    %v1212 = vld [vmem:[%s17 + $0x8] sm:$0xf]
    %v1213 = vld [vmem:[%s17 + $0xc] sm:$0xf]
    %v1214 = vld [vmem:[%s17 + $0x10] sm:$0xf]
    %v1215 = vld [vmem:[%s17 + $0x14] sm:$0xf]
    %v1216 = vld [vmem:[%s17 + $0x18] sm:$0xf]
    %v1217 = vld [vmem:[%s17 + $0x1c] sm:$0xf]
    %v1218 = vld [vmem:[%s17 + $0x20] sm:$0xf]
    %v1219 = vld [vmem:[%s17 + $0x24] sm:$0xf]
    %v1220 = vld [vmem:[%s17 + $0x28] sm:$0xf]
    %v1221 = vld [vmem:[%s17 + $0x2c] sm:$0xf]
    %v1222 = vld [vmem:[%s17 + $0x30] sm:$0xf]
    %v1223 = vld [vmem:[%s17 + $0x34] sm:$0xf]
    %v1224 = vld [vmem:[%s17 + $0x38] sm:$0xf]
    %v1225 = vld [vmem:[%s17 + $0x3c] sm:$0xf]
    %v1226 = vld [vmem:[%s18] sm:$0x1]
    %v1228 = vlaneseq
    %v1229 = vshrl.u32 %v1228, 7
    %v1230 = vsub.s32 0, %v1229
    %v1231 = vrot.slane %v1226, %v1230
    %v1249 = vunpack.c.l.b16 %v1210
    %v1250 = vunpack.c.l.b16 %v1211
    %v1251 = vunpack.c.l.b16 %v1212
    %v1252 = vunpack.c.l.b16 %v1213
    %v1253 = vunpack.c.l.b16 %v1214
    %v1254 = vunpack.c.l.b16 %v1215
    %v1255 = vunpack.c.l.b16 %v1216
    %v1256 = vunpack.c.l.b16 %v1217
    %v1257 = vunpack.c.l.b16 %v1218
    %v1258 = vunpack.c.l.b16 %v1219
    %v1259 = vunpack.c.l.b16 %v1220
    %v1260 = vunpack.c.l.b16 %v1221
    %v1261 = vunpack.c.l.b16 %v1222
    %v1262 = vunpack.c.l.b16 %v1223
    %v1263 = vunpack.c.l.b16 %v1224
    %v1264 = vunpack.c.l.b16 %v1225
    %v1265 = vpack.c.b16 %v1250, %v1249
    %v1266 = vpack.c.b16 %v1252, %v1251
    %v1267 = vpack.c.b16 %v1254, %v1253
    %v1268 = vpack.c.b16 %v1256, %v1255
    %v1269 = vpack.c.b16 %v1258, %v1257
    %v1270 = vpack.c.b16 %v1260, %v1259
    %v1271 = vpack.c.b16 %v1262, %v1261
    %v1272 = vpack.c.b16 %v1264, %v1263
    %1281 = vmatprep.subr.bf16.mxu0 0
    %1282 = vmatpush1.bf16.msra.mxu0 %v1265
    %1283 = vmatprep.subr.bf16.mxu0 0
    %1284 = vmatpush1.bf16.msra.mxu0 %v1266
    %1285 = vmatprep.subr.bf16.mxu0 0
    %1286 = vmatpush1.bf16.msra.mxu0 %v1267
    %1287 = vmatprep.subr.bf16.mxu0 0
    %1288 = vmatpush1.bf16.msra.mxu0 %v1268
    %1289 = vmatprep.subr.bf16.mxu0 0
    %1290 = vmatpush1.bf16.msra.mxu0 %v1269
    %1291 = vmatprep.subr.bf16.mxu0 0
    %1292 = vmatpush1.bf16.msra.mxu0 %v1270
    %1293 = vmatprep.subr.bf16.mxu0 0
    %1294 = vmatpush1.bf16.msra.mxu0 %v1271
    %1295 = vmatprep.subr.bf16.mxu0 0
    %1296 = vmatpush1.bf16.msra.mxu0 %v1272
    %1297 = vmatprep.subr.bf16.mxu0 0
    %1298 = vmatpush1.bf16.msra.mxu0 0
    %1299 = vmatprep.subr.bf16.mxu0 0
    %1300 = vmatpush1.bf16.msra.mxu0 0
    %1301 = vmatprep.subr.bf16.mxu0 0
    %1302 = vmatpush1.bf16.msra.mxu0 0
    %1303 = vmatprep.subr.bf16.mxu0 0
    %1304 = vmatpush1.bf16.msra.mxu0 0
    %1305 = vmatprep.subr.bf16.mxu0 0
    %1306 = vmatpush1.bf16.msra.mxu0 0
    %1307 = vmatprep.subr.bf16.mxu0 0
    %1308 = vmatpush1.bf16.msra.mxu0 0
    %1309 = vmatprep.subr.bf16.mxu0 0
    %1310 = vmatpush1.bf16.msra.mxu0 0
    %1311 = vmatprep.subr.bf16.mxu0 0
    %1312 = vmatpush1.bf16.msra.mxu0 0
    %1313 = vmatprep.mubr.bf16.mxu0 0
    %1314 = vmatmul.mubr.bf16.gmra.mrb[0].mxu0 %v1208
    %v1315 = vpop.f32.mrb[0].mxu0
    %v1316 = vadd.f32 %v1231, %v1315
    %v1317 = vpop.f32.mrb[0].mxu0
    %v1318 = vpop.f32.mrb[0].mxu0
    %v1319 = vadd.f32 %v1231, %v1318
    %v1320 = vpop.f32.mrb[0].mxu0
    %1321 = vdwg.mxu0
    %v1322 = vmul.f32 %v1316, 0.01
    %v1323 = vmul.f32 %v1319, 0.01
    %v1324 = vmax.f32 %v1316, %v1322
    %v1325 = vmax.f32 %v1319, %v1323
    %v1326 = vld [vmem:[%s16] sm:$0x1]
    %v1328 = vlaneseq
    %v1329 = vshrl.u32 %v1328, 7
    %v1330 = vsub.s32 0, %v1329
    %v1331 = vrot.slane %v1326, %v1330
    %v1333 = vmul.f32 %v1202, %v1331
    %v1334 = vsel %vm334, %v1333, 0.0
    %1335 = vadd.xlane.f32.xlu0 %v1334
    %v1336 = vpop.xlane.xlu0 %1335
    %v1337 = vsel %vm110, %v1336, -1e+30
    %v1338 = vsel %vm234, %v1337, -inf
    %v1339 = vrot.slane %v1338, 4
    %v1340 = vmax.f32 %v1338, %v1339
    %v1341 = vrot.slane %v1340, 2
    %v1342 = vmax.f32 %v1340, %v1341
    %v1343 = vrot.slane %v1342, 1
    %v1344 = vmax.f32 %v1342, %v1343
    %v1345 = vsel %vm110, %v1344, -1e+30
    %v1346 = vsel %vm234, %v1345, -inf
    %1347 = vmax.xlane.f32.xlu0 %v1346
    %v1348 = vpop.xlane.xlu0 %1347
    %v1349 = vsub.f32 %v1336, %v1348
    %v1350 = vmul.f32 %v1349, 1.442695
    %v1351 = vpow.pop %v1350
    %v1352 = vsel %vm110, %v1351, 0.0
    %v1353 = vsel %vm234, %v1352, 0.0
    %v1354 = vrot.slane %v1353, 4
    %v1355 = vadd.f32 %v1353, %v1354
    %v1356 = vrot.slane %v1355, 2
    %v1357 = vadd.f32 %v1355, %v1356
    %v1358 = vrot.slane %v1357, 1
    %v1359 = vadd.f32 %v1357, %v1358
    %v1360 = vsel %vm110, %v1359, 0.0
    %v1361 = vsel %vm234, %v1360, 0.0
    %1362 = vadd.xlane.f32.xlu0 %v1361
    %v1363 = vpop.xlane.xlu0 %1362
    %v1364 = vadd.f32 %v1363, 1e-16
    %v1365 = vrcp.pop %v1364
    %v1366 = vmul.f32 %v1351, %v1365
    %v1367 = vld [vmem:[%s19] sm:$0x1]
    %v1369 = vlaneseq
    %v1370 = vshrl.u32 %v1369, 7
    %v1371 = vsub.s32 0, %v1370
    %v1372 = vrot.slane %v1367, %v1371
    %v1374 = vmul.f32 %v1324, %v1372
    %v1375 = vmul.f32 %v1325, %v1372
    %v1376 = vsel %vm334, %v1374, 0.0
    %1377 = vadd.xlane.f32.xlu0 %v1376
    %v1378 = vpop.xlane.xlu0 %1377
    %v1379 = vsel %vm334, %v1375, 0.0
    %1380 = vadd.xlane.f32.xlu0 %v1379
    %v1381 = vpop.xlane.xlu0 %1380
    %v1382 = vsel %vm119, %v1378, -1e+30
    %v1383 = vsel %vm120, %v1381, -1e+30
    %v1384 = vsel %vm234, %v1382, -inf
    %v1385 = vsel %vm234, %v1383, -inf
    %v1386 = vmax.f32 %v1384, %v1385
    %v1387 = vrot.slane %v1386, 4
    %v1388 = vmax.f32 %v1386, %v1387
    %v1389 = vrot.slane %v1388, 2
    %v1390 = vmax.f32 %v1388, %v1389
    %v1391 = vrot.slane %v1390, 1
    %v1392 = vmax.f32 %v1390, %v1391
    %v1393 = vsel %vm119, %v1392, -1e+30
    %v1394 = vsel %vm120, %v1392, -1e+30
    %v1395 = vsel %vm234, %v1393, -inf
    %1396 = vmax.xlane.f32.xlu0 %v1395
    %v1397 = vpop.xlane.xlu0 %1396
    %v1398 = vsel %vm234, %v1394, -inf
    %1399 = vmax.xlane.f32.xlu0 %v1398
    %v1400 = vpop.xlane.xlu0 %1399
    %v1401 = vsub.f32 %v1378, %v1397
    %v1402 = vsub.f32 %v1381, %v1400
    %v1403 = vmul.f32 %v1401, 1.442695
    %v1404 = vpow.pop %v1403
    %v1405 = vmul.f32 %v1402, 1.442695
    %v1406 = vpow.pop %v1405
    %v1407 = vsel %vm119, %v1404, 0.0
    %v1408 = vsel %vm120, %v1406, 0.0
    %v1409 = vsel %vm234, %v1407, 0.0
    %v1410 = vsel %vm234, %v1408, 0.0
    %v1411 = vadd.f32 %v1409, %v1410
    %v1412 = vrot.slane %v1411, 4
    %v1413 = vadd.f32 %v1411, %v1412
    %v1414 = vrot.slane %v1413, 2
    %v1415 = vadd.f32 %v1413, %v1414
    %v1416 = vrot.slane %v1415, 1
    %v1417 = vadd.f32 %v1415, %v1416
    %v1418 = vsel %vm119, %v1417, 0.0
    %v1419 = vsel %vm120, %v1417, 0.0
    %v1420 = vsel %vm234, %v1418, 0.0
    %1421 = vadd.xlane.f32.xlu0 %v1420
    %v1422 = vpop.xlane.xlu0 %1421
    %v1423 = vsel %vm234, %v1419, 0.0
    %1424 = vadd.xlane.f32.xlu0 %v1423
    %v1425 = vpop.xlane.xlu0 %1424
    %v1426 = vadd.f32 %v1422, 1e-16
    %v1427 = vadd.f32 %v1425, 1e-16
    %v1428 = vrcp.pop %v1426
    %v1429 = vmul.f32 %v1404, %v1428
    %v1430 = vrcp.pop %v1427
    %v1431 = vmul.f32 %v1406, %v1430
    %v1432 = vmul.f32 %v1366, %v1076
    %v1433 = vpack.c.bf16 %v1432, %v1432
    %v1434 = vmul.f32 %v1429, %v513
    %v1435 = vmul.f32 %v1431, %v516
    %v1436 = vpack.c.bf16 %v1435, %v1434
    %v1438 = vsel %vm334, %v1433, 0
    %1440 = vrot.lane.b32.xlu0 %v1436, 64
    %v1441 = vpop.permute.xlu0 %1440
    %v1443 = vsel %vm334, 0, %v1441
    %v1445 = vrot.slane %v1443, 4
    %v1447 = vsel %vm143, %v1438, %v1445
    %v1450 = vrot.slane %v138, 4
    %v1453 = vsel %vm143, %v133, %v1450
    %1455 = vxpose.xlu0.c.b16.start [1/8] %v1453, 128
    %1456 = vxpose.xlu0.c.b16.cont [2/8] %v1450, 128
    %1457 = vxpose.xlu0.c.b16.cont [3/8] 0, 128
    %1458 = vxpose.xlu0.c.b16.cont [4/8] 0, 128
    %1459 = vxpose.xlu0.c.b16.cont [5/8] 0, 128
    %1460 = vxpose.xlu0.c.b16.cont [6/8] 0, 128
    %1461 = vxpose.xlu0.c.b16.cont [7/8] 0, 128
    %1462 = vxpose.xlu0.c.b16.end [8/8] 0, 128
    %v1463 = vpop.trf.xlu0
    %v1464 = vpop.trf.xlu0
    %v1465 = vpop.trf.xlu0
    %v1466 = vpop.trf.xlu0
    %v1467 = vpop.trf.xlu0
    %v1468 = vpop.trf.xlu0
    %v1469 = vpop.trf.xlu0
    %v1470 = vpop.trf.xlu0
    %vm1471 = vcmask 195584
    %v1473 = vsel %vm1471, %v1463, 0
    %v1475 = vsel %vm143, %v1445, 0
    %1477 = vmatprep.subr.bf16.mxu0 0
    %1478 = vmatpush1.bf16.msra.mxu0 %v1447
    %1479 = vmatprep.subr.bf16.mxu0 0
    %1480 = vmatpush1.bf16.msra.mxu0 %v1475
    %1481 = vmatprep.subr.bf16.mxu0 0
    %1482 = vmatpush1.bf16.msra.mxu0 0
    %1483 = vmatprep.subr.bf16.mxu0 0
    %1484 = vmatpush1.bf16.msra.mxu0 0
    %1485 = vmatprep.subr.bf16.mxu0 0
    %1486 = vmatpush1.bf16.msra.mxu0 0
    %1487 = vmatprep.subr.bf16.mxu0 0
    %1488 = vmatpush1.bf16.msra.mxu0 0
    %1489 = vmatprep.subr.bf16.mxu0 0
    %1490 = vmatpush1.bf16.msra.mxu0 0
    %1491 = vmatprep.subr.bf16.mxu0 0
    %1492 = vmatpush1.bf16.msra.mxu0 0
    %1493 = vmatprep.subr.bf16.mxu0 0
    %1494 = vmatpush1.bf16.msra.mxu0 0
    %1495 = vmatprep.subr.bf16.mxu0 0
    %1496 = vmatpush1.bf16.msra.mxu0 0
    %1497 = vmatprep.subr.bf16.mxu0 0
    %1498 = vmatpush1.bf16.msra.mxu0 0
    %1499 = vmatprep.subr.bf16.mxu0 0
    %1500 = vmatpush1.bf16.msra.mxu0 0
    %1501 = vmatprep.subr.bf16.mxu0 0
    %1502 = vmatpush1.bf16.msra.mxu0 0
    %1503 = vmatprep.subr.bf16.mxu0 0
    %1504 = vmatpush1.bf16.msra.mxu0 0
    %1505 = vmatprep.subr.bf16.mxu0 0
    %1506 = vmatpush1.bf16.msra.mxu0 0
    %1507 = vmatprep.subr.bf16.mxu0 0
    %1508 = vmatpush1.bf16.msra.mxu0 0
    %1509 = vmatprep.mubr.bf16.mxu0 0
    %1510 = vmatmul.mubr.bf16.gmra.mrb[0].mxu0 %v1473
    %v1511 = vpop.f32.mrb[0].mxu0
    %v1512 = vadd.f32 0.0, %v1511
    %v1513 = vpop.f32.mrb[0].mxu0
    %v1514 = vpop.f32.mrb[0].mxu0
    %v1515 = vpop.f32.mrb[0].mxu0
    %1516 = vdwg.mxu0
    %v1517 = vpack.c.bf16 %v1512, %v1512
    %1519 = vrot.lane.b32.xlu0 %v1517, 64
    %v1520 = vpop.permute.xlu0 %1519
    %v1522 = vsel %vm334, %v83, %v1520
    %v1524 = vld [vmem:[%s20] sm:$0xf]
    %v1525 = vld [vmem:[%s20 + $0x4] sm:$0xf]
    %v1526 = vld [vmem:[%s20 + $0x8] sm:$0xf]
    %v1527 = vld [vmem:[%s20 + $0xc] sm:$0xf]
    %v1528 = vld [vmem:[%s20 + $0x10] sm:$0xf]
    %v1529 = vld [vmem:[%s20 + $0x14] sm:$0xf]
    %v1530 = vld [vmem:[%s20 + $0x18] sm:$0xf]
    %v1531 = vld [vmem:[%s20 + $0x1c] sm:$0xf]
    %v1532 = vld [vmem:[%s20 + $0x20] sm:$0xf]
    %v1533 = vld [vmem:[%s20 + $0x24] sm:$0xf]
    %v1534 = vld [vmem:[%s20 + $0x28] sm:$0xf]
    %v1535 = vld [vmem:[%s20 + $0x2c] sm:$0xf]
    %v1536 = vld [vmem:[%s20 + $0x30] sm:$0xf]
    %v1537 = vld [vmem:[%s20 + $0x34] sm:$0xf]
    %v1538 = vld [vmem:[%s20 + $0x38] sm:$0xf]
    %v1539 = vld [vmem:[%s20 + $0x3c] sm:$0xf]
    %v1540 = vld [vmem:[%s20 + $0x40] sm:$0xf]
    %v1541 = vld [vmem:[%s20 + $0x44] sm:$0xf]
    %v1542 = vld [vmem:[%s20 + $0x48] sm:$0xf]
    %v1543 = vld [vmem:[%s20 + $0x4c] sm:$0xf]
    %v1544 = vld [vmem:[%s20 + $0x50] sm:$0xf]
    %v1545 = vld [vmem:[%s20 + $0x54] sm:$0xf]
    %v1546 = vld [vmem:[%s20 + $0x58] sm:$0xf]
    %v1547 = vld [vmem:[%s20 + $0x5c] sm:$0xf]
    %v1548 = vld [vmem:[%s21] sm:$0x1]
    %v1550 = vlaneseq
    %v1551 = vshrl.u32 %v1550, 7
    %v1552 = vsub.s32 0, %v1551
    %v1553 = vrot.slane %v1548, %v1552
    %v1579 = vunpack.c.l.b16 %v1524
    %v1580 = vunpack.c.l.b16 %v1525
    %v1581 = vunpack.c.l.b16 %v1526
    %v1582 = vunpack.c.l.b16 %v1527
    %v1583 = vunpack.c.l.b16 %v1528
    %v1584 = vunpack.c.l.b16 %v1529
    %v1585 = vunpack.c.l.b16 %v1530
    %v1586 = vunpack.c.l.b16 %v1531
    %v1587 = vunpack.c.l.b16 %v1532
    %v1588 = vunpack.c.l.b16 %v1533
    %v1589 = vunpack.c.l.b16 %v1534
    %v1590 = vunpack.c.l.b16 %v1535
    %v1591 = vunpack.c.l.b16 %v1536
    %v1592 = vunpack.c.l.b16 %v1537
    %v1593 = vunpack.c.l.b16 %v1538
    %v1594 = vunpack.c.l.b16 %v1539
    %v1595 = vunpack.c.l.b16 %v1540
    %v1596 = vunpack.c.l.b16 %v1541
    %v1597 = vunpack.c.l.b16 %v1542
    %v1598 = vunpack.c.l.b16 %v1543
    %v1599 = vunpack.c.l.b16 %v1544
    %v1600 = vunpack.c.l.b16 %v1545
    %v1601 = vunpack.c.l.b16 %v1546
    %v1602 = vunpack.c.l.b16 %v1547
    %v1603 = vpack.c.b16 %v1580, %v1579
    %v1604 = vpack.c.b16 %v1582, %v1581
    %v1605 = vpack.c.b16 %v1584, %v1583
    %v1606 = vpack.c.b16 %v1586, %v1585
    %v1607 = vpack.c.b16 %v1588, %v1587
    %v1608 = vpack.c.b16 %v1590, %v1589
    %v1609 = vpack.c.b16 %v1592, %v1591
    %v1610 = vpack.c.b16 %v1594, %v1593
    %v1611 = vpack.c.b16 %v1596, %v1595
    %v1612 = vpack.c.b16 %v1598, %v1597
    %v1613 = vpack.c.b16 %v1600, %v1599
    %v1614 = vpack.c.b16 %v1602, %v1601
    %v1627 = vsel %vm334, %v1520, 0
    %1629 = vmatprep.subr.bf16.mxu0 0
    %1630 = vmatpush1.bf16.msra.mxu0 %v1603
    %1631 = vmatprep.subr.bf16.mxu0 0
    %1632 = vmatpush1.bf16.msra.mxu0 %v1604
    %1633 = vmatprep.subr.bf16.mxu0 0
    %1634 = vmatpush1.bf16.msra.mxu0 %v1605
    %1635 = vmatprep.subr.bf16.mxu0 0
    %1636 = vmatpush1.bf16.msra.mxu0 %v1606
    %1637 = vmatprep.subr.bf16.mxu0 0
    %1638 = vmatpush1.bf16.msra.mxu0 %v1607
    %1639 = vmatprep.subr.bf16.mxu0 0
    %1640 = vmatpush1.bf16.msra.mxu0 %v1608
    %1641 = vmatprep.subr.bf16.mxu0 0
    %1642 = vmatpush1.bf16.msra.mxu0 %v1609
    %1643 = vmatprep.subr.bf16.mxu0 0
    %1644 = vmatpush1.bf16.msra.mxu0 %v1610
    %1645 = vmatprep.subr.bf16.mxu0 0
    %1646 = vmatpush1.bf16.msra.mxu0 %v1611
    %1647 = vmatprep.subr.bf16.mxu0 0
    %1648 = vmatpush1.bf16.msra.mxu0 %v1612
    %1649 = vmatprep.subr.bf16.mxu0 0
    %1650 = vmatpush1.bf16.msra.mxu0 %v1613
    %1651 = vmatprep.subr.bf16.mxu0 0
    %1652 = vmatpush1.bf16.msra.mxu0 %v1614
    %1653 = vmatprep.subr.bf16.mxu0 0
    %1654 = vmatpush1.bf16.msra.mxu0 0
    %1655 = vmatprep.subr.bf16.mxu0 0
    %1656 = vmatpush1.bf16.msra.mxu0 0
    %1657 = vmatprep.subr.bf16.mxu0 0
    %1658 = vmatpush1.bf16.msra.mxu0 0
    %1659 = vmatprep.subr.bf16.mxu0 0
    %1660 = vmatpush1.bf16.msra.mxu0 0
    %1661 = vmatprep.mubr.bf16.mxu0 %v1627
    %1662 = vmatmul.mubr.bf16.gmra.mrb[0].mxu0 %v1522
    %v1663 = vpop.f32.mrb[0].mxu0
    %v1664 = vadd.f32 %v1553, %v1663
    %v1665 = vpop.f32.mrb[0].mxu0
    %v1666 = vpop.f32.mrb[0].mxu0
    %v1667 = vpop.f32.mrb[0].mxu0
    %1668 = vdwg.mxu0
    %vm1669 = vcmask 517120
    %1670 = vst.msk [vmem:[#allocation6] sm:$0x3] %vm1669, %v1664
    // Predicated region
    $region90: #{metalayer_forward.1} parent=1 // pred_check
      _
    $region91: #{metalayer_forward.1} parent=1 // pred_check_branch
      %1672 = sbr.rel (0) target = $region93
    $region92: #{metalayer_forward.1} parent=1 // pred_region
      %s1674 = ssub.s32 128, 128
      %1675 = vsyncadd [#allocation3], %s1674
      %s1677 = sshll.u32 [#allocation2], 4
      %s1678 = int_to_ptr.vmem [resolvable:$true] %s1677
      %1680 = dma.vmem_to_hbm [thread:$0]  %s1678, 128, %s22, [#allocation3]
    $region93: #{metalayer_forward.1} parent=1 // pred_fallthru
      _
    // Predicated region
    $region94: #{metalayer_forward.1} parent=1 // pred_check
      _
    $region95: #{metalayer_forward.1} parent=1 // pred_check_branch
      %1682 = sbr.rel (0) target = $region97
    $region96: #{metalayer_forward.1} parent=1 // pred_region
      %s1684 = ssub.s32 256, 256
      %1685 = vsyncadd [#allocation5], %s1684
      %s1686 = sshll.u32 [#allocation4], 4
      %s1687 = int_to_ptr.vmem [resolvable:$true] %s1686
      %1692 = dma.vmem_to_hbm [thread:$0]  %s1687, 256, %s23, [#allocation5], 128, 128, 8
    $region97: #{metalayer_forward.1} parent=1 // pred_fallthru
      _
    // Predicated region
    $region98: #{metalayer_forward.1} parent=1 // pred_check
      _
    $region99: #{metalayer_forward.1} parent=1 // pred_check_branch
      %1694 = sbr.rel (0) target = $region101
    $region100: #{metalayer_forward.1} parent=1 // pred_region
      %s1696 = ssub.s32 32, 32
      %1697 = vsyncadd [#allocation5], %s1696
      %s1699 = sshll.u32 [#allocation6], 4
      %s1700 = int_to_ptr.vmem [resolvable:$true] %s1699
      %1702 = dma.vmem_to_hbm [thread:$0]  %s1700, 32, %s24, [#allocation5]
    $region101: #{metalayer_forward.1} parent=1 // pred_fallthru
      _
    // Predicated region
    $region102: #{metalayer_forward.1} parent=1 // pred_check
      _
    $region103: #{metalayer_forward.1} parent=1 // pred_check_branch
      %1704 = sbr.rel (0) target = $region105
    $region104: #{metalayer_forward.1} parent=1 // pred_region
      %1705 = dma.done [#allocation3], 128
    $region105: #{metalayer_forward.1} parent=1 // pred_fallthru
      _
    // Predicated region
    $region106: #{metalayer_forward.1} parent=1 // pred_check
      _
    $region107: #{metalayer_forward.1} parent=1 // pred_check_branch
      %1707 = sbr.rel (0) target = $region109
    $region108: #{metalayer_forward.1} parent=1 // pred_region
      %1708 = dma.done [#allocation5], 256
    $region109: #{metalayer_forward.1} parent=1 // pred_fallthru
      _
    // Predicated region
    $region110: #{metalayer_forward.1} parent=1 // pred_check
      _
    $region111: #{metalayer_forward.1} parent=1 // pred_check_branch
      %1710 = sbr.rel (0) target = $region113
    $region112: #{metalayer_forward.1} parent=1 // pred_region
      %1711 = dma.done [#allocation5], 32
    $region113: #{metalayer_forward.1} parent=1 // pred_fallthru
      _
    %1712 = vsyncpa [#allocation3], 1
    %1713 = vsyncpa [#allocation5], 1

</llo_original>
